<compile_context>
chip_gen: v6e
topology: v6e:2x2x1
jax: 0.10.0
libtpu: 0.0.40
codegen_flags: <defaults>
</compile_context>

<pallas_src>
import functools

import jax
import jax.numpy as jnp
from jax.experimental import pallas as pl
from jax.experimental.pallas import tpu as pltpu

ARCH = (500, 400, 200)   # hidden layer widths from the module
LN_EPS = 1e-5            # PyTorch nn.LayerNorm default eps


def _bf16_dot(a, b):
    """MXU matmul: bf16 inputs, f32 accumulation."""
    return jnp.dot(a.astype(jnp.bfloat16), b.astype(jnp.bfloat16),
                   preferred_element_type=jnp.float32)


def _q_mlp_kernel(state_ref, action_ref,
                  w0s_ref, w0a_ref, b0_ref, g0_ref, be0_ref,
                  w1_ref, b1_ref, g1_ref, be1_ref,
                  w2_ref, b2_ref, g2_ref, be2_ref,
                  w3_ref, b3_ref,
                  out_ref):
    """One batch tile: [s,a] -> 3x(Linear+ReLU+LayerNorm) -> Linear(->1)."""

    def relu_ln(y, g_ref, be_ref):
        y = jnp.maximum(y, 0.0)                              # ReLU (VPU, f32)
        mean = jnp.mean(y, axis=-1, keepdims=True)           # LN over features
        cent = y - mean
        var = jnp.mean(cent * cent, axis=-1, keepdims=True)  # biased variance
        y = cent * jax.lax.rsqrt(var + LN_EPS)               # EUP rsqrt
        return y * g_ref[...] + be_ref[...]

    # Layer 0: cat(state, action) @ W0  ==  state @ W0[:sd] + action @ W0[sd:]
    h = (_bf16_dot(state_ref[...], w0s_ref[...])
         + _bf16_dot(action_ref[...], w0a_ref[...])
         + b0_ref[...])
    h = relu_ln(h, g0_ref, be0_ref)

    h = _bf16_dot(h, w1_ref[...]) + b1_ref[...]
    h = relu_ln(h, g1_ref, be1_ref)

    h = _bf16_dot(h, w2_ref[...]) + b2_ref[...]
    h = relu_ln(h, g2_ref, be2_ref)

    # Final Linear to 1 output: elementwise multiply + lane reduce (f32).
    # w3_ref is the transposed weight row (1, 200); b3_ref is (1, 1).
    out_ref[...] = (jnp.sum(h * w3_ref[...], axis=-1, keepdims=True)
                    + b3_ref[...])


def init_q_params(key, state_dim, action_dim, dtype=jnp.float32):
    """Init mimicking nn.Linear (uniform +-1/sqrt(fan_in)) and nn.LayerNorm
    (gamma=1, beta=0). Weights stored as (in, out)."""
    dims = [state_dim + action_dim] + list(ARCH) + [1]
    params = {}
    for i in range(len(dims) - 1):
        fan_in, fan_out = dims[i], dims[i + 1]
        key, kw, kb = jax.random.split(key, 3)
        bound = 1.0 / jnp.sqrt(jnp.float32(fan_in))
        params[f"w{i}"] = jax.random.uniform(
            kw, (fan_in, fan_out), dtype, minval=-bound, maxval=bound)
        params[f"b{i}"] = jax.random.uniform(
            kb, (1, fan_out), dtype, minval=-bound, maxval=bound)
    for i, d in enumerate(ARCH):
        params[f"g{i}"] = jnp.ones((1, d), dtype)
        params[f"beta{i}"] = jnp.zeros((1, d), dtype)
    return params


@functools.partial(jax.jit, static_argnames=("tile_m",))
def q_forward(state, action, params, tile_m=256):
    batch, state_dim = state.shape
    action_dim = action.shape[1]
    in_dim = state_dim + action_dim

    # Stream activations in bf16: numerically identical to casting inside the
    # kernel's bf16 matmul, but halves the streamed HBM bytes.
    state = state.astype(jnp.bfloat16)
    action = action.astype(jnp.bfloat16)

    # Split W0 so the concat happens inside the kernel; hidden-layer weights in
    # bf16 (accumulation stays f32 in-kernel); LN params / biases stay f32.
    w0s = params["w0"][:state_dim].astype(jnp.bfloat16)
    w0a = params["w0"][state_dim:].astype(jnp.bfloat16)
    w1 = params["w1"].astype(jnp.bfloat16)
    w2 = params["w2"].astype(jnp.bfloat16)
    w3_row = params["w3"].T.astype(jnp.float32)   # (1, 200) for the VPU reduce
    b0 = params["b0"].astype(jnp.float32)
    b1 = params["b1"].astype(jnp.float32)
    b2 = params["b2"].astype(jnp.float32)
    b3 = params["b3"].astype(jnp.float32)

    # Batch tile: never larger than the batch (a block equal to the full batch
    # is always legal). Pad the batch to a tile multiple so every grid step is
    # a full block (no partial-tile masking).
    tm = min(tile_m, batch)
    padded = pl.cdiv(batch, tm) * tm
    if padded != batch:
        pad = padded - batch
        state = jnp.pad(state, ((0, pad), (0, 0)))
        action = jnp.pad(action, ((0, pad), (0, 0)))
    grid = (padded // tm,)

    def tile_spec(arr):
        return pl.BlockSpec((tm, arr.shape[1]), lambda i: (i, 0))

    def resident_spec(arr):
        # Full-extent block with a constant index -> DMA'd once, stays resident.
        return pl.BlockSpec(arr.shape, lambda i: (0, 0))

    params_list = [
        w0s, w0a, b0, params["g0"], params["beta0"],
        w1, b1, params["g1"], params["beta1"],
        w2, b2, params["g2"], params["beta2"],
        w3_row, b3,
    ]

    in_specs = ([tile_spec(state), tile_spec(action)]
                + [resident_spec(p) for p in params_list])

    flops = 2 * padded * (in_dim * ARCH[0] + ARCH[0] * ARCH[1]
                          + ARCH[1] * ARCH[2] + ARCH[2])
    bytes_accessed = ((state.size + action.size) * 2 + padded * 4
                      + sum(int(p.size) * p.dtype.itemsize for p in params_list))

    out = pl.pallas_call(
        _q_mlp_kernel,
        grid=grid,
        in_specs=in_specs,
        out_specs=pl.BlockSpec((tm, 1), lambda i: (i, 0)),
        out_shape=jax.ShapeDtypeStruct((padded, 1), jnp.float32),
        compiler_params=pltpu.CompilerParams(
            dimension_semantics=("parallel",)),
        cost_estimate=pl.CostEstimate(
            flops=flops, transcendentals=3 * padded,
            bytes_accessed=bytes_accessed),
    )(state, action, *params_list)

    return out[:batch]


def q_forward_ref(state, action, params):
    """Pure-JAX reference with matching numerics (bf16 matmuls, f32 accum/LN)."""
    state = state.astype(jnp.float32)
    action = action.astype(jnp.float32)
    sd = state.shape[1]

    def relu_ln(h, i):
        h = jnp.maximum(h, 0.0)
        mean = jnp.mean(h, axis=-1, keepdims=True)
        var = jnp.mean((h - mean) ** 2, axis=-1, keepdims=True)
        h = (h - mean) * jax.lax.rsqrt(var + LN_EPS)
        return h * params[f"g{i}"] + params[f"beta{i}"]

    h = (_bf16_dot(state, params["w0"][:sd])
         + _bf16_dot(action, params["w0"][sd:]) + params["b0"])
    h = relu_ln(h, 0)
    h = relu_ln(_bf16_dot(h, params["w1"]) + params["b1"], 1)
    h = relu_ln(_bf16_dot(h, params["w2"]) + params["b2"], 2)
    return jnp.sum(h * params["w3"].T, axis=-1, keepdims=True) + params["b3"]


if __name__ == "__main__":
    key = jax.random.PRNGKey(0)
    k_params, k_state, k_action = jax.random.split(key, 3)

    batch, state_dim, action_dim = 2, 16, 8
    params = init_q_params(k_params, state_dim, action_dim)
    state = jax.random.normal(k_state, (batch, state_dim), jnp.float32)
    action = jax.random.normal(k_action, (batch, action_dim), jnp.float32)

    q = q_forward(state, action, params)
    jax.block_until_ready(q)
    q_ref = q_forward_ref(state, action, params)
    assert q.shape == (batch, 1)
    assert jnp.allclose(q, q_ref, atol=1e-3, rtol=1e-3), (q, q_ref)

    # Multiple batch tiles (weights resident across tiles).
    k2s, k2a = jax.random.split(jax.random.PRNGKey(1))
    batch2 = 48
    state2 = jax.random.normal(k2s, (batch2, state_dim), jnp.float32)
    action2 = jax.random.normal(k2a, (batch2, action_dim), jnp.float32)
    q2 = q_forward(state2, action2, params, tile_m=16)
    jax.block_until_ready(q2)
    q2_ref = q_forward_ref(state2, action2, params)
    assert q2.shape == (batch2, 1)
    assert jnp.allclose(q2, q2_ref, atol=1e-3, rtol=1e-3), (q2, q2_ref)

    # Non-divisible batch (exercises the wrapper-side padding path).
    k3s, k3a = jax.random.split(jax.random.PRNGKey(2))
    batch3 = 50
    state3 = jax.random.normal(k3s, (batch3, state_dim), jnp.float32)
    action3 = jax.random.normal(k3a, (batch3, action_dim), jnp.float32)
    q3 = q_forward(state3, action3, params, tile_m=16)
    jax.block_until_ready(q3)
    q3_ref = q_forward_ref(state3, action3, params)
    assert q3.shape == (batch3, 1)
    assert jnp.allclose(q3, q3_ref, atol=1e-3, rtol=1e-3), (q3, q3_ref)

    print("KERNEL_OK")
</pallas_src>

<mosaic_0001>
module attributes {stable_mosaic.version = 11 : i64} {
  func.func @_q_mlp_kernel(%arg0: i32, %arg1: memref<2x16xbf16, #tpu.memory_space<vmem>>, %arg2: memref<2x8xbf16, #tpu.memory_space<vmem>>, %arg3: memref<16x500xbf16, #tpu.memory_space<vmem>>, %arg4: memref<8x500xbf16, #tpu.memory_space<vmem>>, %arg5: memref<1x500xf32, #tpu.memory_space<vmem>>, %arg6: memref<1x500xf32, #tpu.memory_space<vmem>>, %arg7: memref<1x500xf32, #tpu.memory_space<vmem>>, %arg8: memref<500x400xbf16, #tpu.memory_space<vmem>>, %arg9: memref<1x400xf32, #tpu.memory_space<vmem>>, %arg10: memref<1x400xf32, #tpu.memory_space<vmem>>, %arg11: memref<1x400xf32, #tpu.memory_space<vmem>>, %arg12: memref<400x200xbf16, #tpu.memory_space<vmem>>, %arg13: memref<1x200xf32, #tpu.memory_space<vmem>>, %arg14: memref<1x200xf32, #tpu.memory_space<vmem>>, %arg15: memref<1x200xf32, #tpu.memory_space<vmem>>, %arg16: memref<1x200xf32, #tpu.memory_space<vmem>>, %arg17: memref<1x1xf32, #tpu.memory_space<vmem>>, %arg18: memref<2x1xf32, #tpu.memory_space<vmem>>) attributes {dimension_semantics = [#tpu.dimension_semantics<parallel>], iteration_bounds = array<i64: 1>, scalar_prefetch = 0 : i64, scratch_operands = 0 : i64, tpu.core_type = #tpu.core_type<tc>, window_params = [{transform_indices = @transform_0, window_bounds = array<i64: 2, 16>}, {transform_indices = @transform_1, window_bounds = array<i64: 2, 8>}, {pipeline_mode = #tpu.pipeline_mode<synchronous>, transform_indices = @transform_2, window_bounds = array<i64: 16, 500>}, {pipeline_mode = #tpu.pipeline_mode<synchronous>, transform_indices = @transform_3, window_bounds = array<i64: 8, 500>}, {pipeline_mode = #tpu.pipeline_mode<synchronous>, transform_indices = @transform_4, window_bounds = array<i64: 1, 500>}, {pipeline_mode = #tpu.pipeline_mode<synchronous>, transform_indices = @transform_5, window_bounds = array<i64: 1, 500>}, {pipeline_mode = #tpu.pipeline_mode<synchronous>, transform_indices = @transform_6, window_bounds = array<i64: 1, 500>}, {pipeline_mode = #tpu.pipeline_mode<synchronous>, transform_indices = @transform_7, window_bounds = array<i64: 500, 400>}, {pipeline_mode = #tpu.pipeline_mode<synchronous>, transform_indices = @transform_8, window_bounds = array<i64: 1, 400>}, {pipeline_mode = #tpu.pipeline_mode<synchronous>, transform_indices = @transform_9, window_bounds = array<i64: 1, 400>}, {pipeline_mode = #tpu.pipeline_mode<synchronous>, transform_indices = @transform_10, window_bounds = array<i64: 1, 400>}, {pipeline_mode = #tpu.pipeline_mode<synchronous>, transform_indices = @transform_11, window_bounds = array<i64: 400, 200>}, {pipeline_mode = #tpu.pipeline_mode<synchronous>, transform_indices = @transform_12, window_bounds = array<i64: 1, 200>}, {pipeline_mode = #tpu.pipeline_mode<synchronous>, transform_indices = @transform_13, window_bounds = array<i64: 1, 200>}, {pipeline_mode = #tpu.pipeline_mode<synchronous>, transform_indices = @transform_14, window_bounds = array<i64: 1, 200>}, {pipeline_mode = #tpu.pipeline_mode<synchronous>, transform_indices = @transform_15, window_bounds = array<i64: 1, 200>}, {pipeline_mode = #tpu.pipeline_mode<synchronous>, transform_indices = @transform_16, window_bounds = array<i64: 1, 1>}, {transform_indices = @transform_17, window_bounds = array<i64: 2, 1>}]} {
    %c0 = arith.constant 0 : index
    %c0_0 = arith.constant 0 : index
    %0 = vector.load %arg1[%c0, %c0_0] : memref<2x16xbf16, #tpu.memory_space<vmem>>, vector<2x16xbf16>
    %c0_1 = arith.constant 0 : index
    %c0_2 = arith.constant 0 : index
    %1 = vector.load %arg3[%c0_1, %c0_2] : memref<16x500xbf16, #tpu.memory_space<vmem>>, vector<16x500xbf16>
    %cst = arith.constant dense<0.000000e+00> : vector<2x500xf32>
    %2 = tpu.matmul %0, %1, %cst {dimension_numbers = #tpu.dot_dimension_numbers<[1], [0], [0], [1], [0, 0, 1, 1], [], []>} : vector<2x16xbf16>, vector<16x500xbf16>, vector<2x500xf32> -> vector<2x500xf32>
    %c0_3 = arith.constant 0 : index
    %c0_4 = arith.constant 0 : index
    %3 = vector.load %arg2[%c0_3, %c0_4] : memref<2x8xbf16, #tpu.memory_space<vmem>>, vector<2x8xbf16>
    %c0_5 = arith.constant 0 : index
    %c0_6 = arith.constant 0 : index
    %4 = vector.load %arg4[%c0_5, %c0_6] : memref<8x500xbf16, #tpu.memory_space<vmem>>, vector<8x500xbf16>
    %cst_7 = arith.constant dense<0.000000e+00> : vector<2x500xf32>
    %5 = tpu.matmul %3, %4, %cst_7 {dimension_numbers = #tpu.dot_dimension_numbers<[1], [0], [0], [1], [0, 0, 1, 1], [], []>} : vector<2x8xbf16>, vector<8x500xbf16>, vector<2x500xf32> -> vector<2x500xf32>
    %6 = arith.addf %2, %5 : vector<2x500xf32>
    %c0_8 = arith.constant 0 : index
    %c0_9 = arith.constant 0 : index
    %7 = vector.load %arg5[%c0_8, %c0_9] : memref<1x500xf32, #tpu.memory_space<vmem>>, vector<1x500xf32>
    %8 = vector.broadcast %7 : vector<1x500xf32> to vector<2x500xf32>
    %9 = arith.addf %6, %8 : vector<2x500xf32>
    %cst_10 = arith.constant 0.000000e+00 : f32
    %10 = vector.broadcast %cst_10 : f32 to vector<2x500xf32>
    %11 = arith.maximumf %9, %10 : vector<2x500xf32>
    %cst_11 = arith.constant dense<0.000000e+00> : vector<2xf32>
    %12 = vector.multi_reduction <add>, %11, %cst_11 [1] : vector<2x500xf32> to vector<2xf32>
    %13 = vector.shape_cast %12 : vector<2xf32> to vector<2x1xf32>
    %cst_12 = arith.constant 5.000000e+02 : f32
    %14 = vector.broadcast %cst_12 : f32 to vector<2x1xf32>
    %15 = arith.divf %13, %14 : vector<2x1xf32>
    %16 = vector.broadcast %15 : vector<2x1xf32> to vector<2x500xf32>
    %17 = arith.subf %11, %16 : vector<2x500xf32>
    %18 = arith.mulf %17, %17 : vector<2x500xf32>
    %cst_13 = arith.constant dense<0.000000e+00> : vector<2xf32>
    %19 = vector.multi_reduction <add>, %18, %cst_13 [1] : vector<2x500xf32> to vector<2xf32>
    %20 = vector.shape_cast %19 : vector<2xf32> to vector<2x1xf32>
    %cst_14 = arith.constant 5.000000e+02 : f32
    %21 = vector.broadcast %cst_14 : f32 to vector<2x1xf32>
    %22 = arith.divf %20, %21 : vector<2x1xf32>
    %cst_15 = arith.constant 9.99999974E-6 : f32
    %23 = vector.broadcast %cst_15 : f32 to vector<2x1xf32>
    %24 = arith.addf %22, %23 : vector<2x1xf32>
    %25 = math.rsqrt %24 : vector<2x1xf32>
    %26 = vector.broadcast %25 : vector<2x1xf32> to vector<2x500xf32>
    %27 = arith.mulf %17, %26 : vector<2x500xf32>
    %c0_16 = arith.constant 0 : index
    %c0_17 = arith.constant 0 : index
    %28 = vector.load %arg6[%c0_16, %c0_17] : memref<1x500xf32, #tpu.memory_space<vmem>>, vector<1x500xf32>
    %29 = vector.broadcast %28 : vector<1x500xf32> to vector<2x500xf32>
    %30 = arith.mulf %27, %29 : vector<2x500xf32>
    %c0_18 = arith.constant 0 : index
    %c0_19 = arith.constant 0 : index
    %31 = vector.load %arg7[%c0_18, %c0_19] : memref<1x500xf32, #tpu.memory_space<vmem>>, vector<1x500xf32>
    %32 = vector.broadcast %31 : vector<1x500xf32> to vector<2x500xf32>
    %33 = arith.addf %30, %32 : vector<2x500xf32>
    %c0_20 = arith.constant 0 : index
    %c0_21 = arith.constant 0 : index
    %34 = vector.load %arg8[%c0_20, %c0_21] : memref<500x400xbf16, #tpu.memory_space<vmem>>, vector<500x400xbf16>
    %35 = arith.truncf %33 : vector<2x500xf32> to vector<2x500xbf16>
    %cst_22 = arith.constant dense<0.000000e+00> : vector<2x400xf32>
    %36 = tpu.matmul %35, %34, %cst_22 {dimension_numbers = #tpu.dot_dimension_numbers<[1], [0], [0], [1], [0, 0, 1, 1], [], []>} : vector<2x500xbf16>, vector<500x400xbf16>, vector<2x400xf32> -> vector<2x400xf32>
    %c0_23 = arith.constant 0 : index
    %c0_24 = arith.constant 0 : index
    %37 = vector.load %arg9[%c0_23, %c0_24] : memref<1x400xf32, #tpu.memory_space<vmem>>, vector<1x400xf32>
    %38 = vector.broadcast %37 : vector<1x400xf32> to vector<2x400xf32>
    %39 = arith.addf %36, %38 : vector<2x400xf32>
    %cst_25 = arith.constant 0.000000e+00 : f32
    %40 = vector.broadcast %cst_25 : f32 to vector<2x400xf32>
    %41 = arith.maximumf %39, %40 : vector<2x400xf32>
    %cst_26 = arith.constant dense<0.000000e+00> : vector<2xf32>
    %42 = vector.multi_reduction <add>, %41, %cst_26 [1] : vector<2x400xf32> to vector<2xf32>
    %43 = vector.shape_cast %42 : vector<2xf32> to vector<2x1xf32>
    %cst_27 = arith.constant 4.000000e+02 : f32
    %44 = vector.broadcast %cst_27 : f32 to vector<2x1xf32>
    %45 = arith.divf %43, %44 : vector<2x1xf32>
    %46 = vector.broadcast %45 : vector<2x1xf32> to vector<2x400xf32>
    %47 = arith.subf %41, %46 : vector<2x400xf32>
    %48 = arith.mulf %47, %47 : vector<2x400xf32>
    %cst_28 = arith.constant dense<0.000000e+00> : vector<2xf32>
    %49 = vector.multi_reduction <add>, %48, %cst_28 [1] : vector<2x400xf32> to vector<2xf32>
    %50 = vector.shape_cast %49 : vector<2xf32> to vector<2x1xf32>
    %cst_29 = arith.constant 4.000000e+02 : f32
    %51 = vector.broadcast %cst_29 : f32 to vector<2x1xf32>
    %52 = arith.divf %50, %51 : vector<2x1xf32>
    %cst_30 = arith.constant 9.99999974E-6 : f32
    %53 = vector.broadcast %cst_30 : f32 to vector<2x1xf32>
    %54 = arith.addf %52, %53 : vector<2x1xf32>
    %55 = math.rsqrt %54 : vector<2x1xf32>
    %56 = vector.broadcast %55 : vector<2x1xf32> to vector<2x400xf32>
    %57 = arith.mulf %47, %56 : vector<2x400xf32>
    %c0_31 = arith.constant 0 : index
    %c0_32 = arith.constant 0 : index
    %58 = vector.load %arg10[%c0_31, %c0_32] : memref<1x400xf32, #tpu.memory_space<vmem>>, vector<1x400xf32>
    %59 = vector.broadcast %58 : vector<1x400xf32> to vector<2x400xf32>
    %60 = arith.mulf %57, %59 : vector<2x400xf32>
    %c0_33 = arith.constant 0 : index
    %c0_34 = arith.constant 0 : index
    %61 = vector.load %arg11[%c0_33, %c0_34] : memref<1x400xf32, #tpu.memory_space<vmem>>, vector<1x400xf32>
    %62 = vector.broadcast %61 : vector<1x400xf32> to vector<2x400xf32>
    %63 = arith.addf %60, %62 : vector<2x400xf32>
    %c0_35 = arith.constant 0 : index
    %c0_36 = arith.constant 0 : index
    %64 = vector.load %arg12[%c0_35, %c0_36] : memref<400x200xbf16, #tpu.memory_space<vmem>>, vector<400x200xbf16>
    %65 = arith.truncf %63 : vector<2x400xf32> to vector<2x400xbf16>
    %cst_37 = arith.constant dense<0.000000e+00> : vector<2x200xf32>
    %66 = tpu.matmul %65, %64, %cst_37 {dimension_numbers = #tpu.dot_dimension_numbers<[1], [0], [0], [1], [0, 0, 1, 1], [], []>} : vector<2x400xbf16>, vector<400x200xbf16>, vector<2x200xf32> -> vector<2x200xf32>
    %c0_38 = arith.constant 0 : index
    %c0_39 = arith.constant 0 : index
    %67 = vector.load %arg13[%c0_38, %c0_39] : memref<1x200xf32, #tpu.memory_space<vmem>>, vector<1x200xf32>
    %68 = vector.broadcast %67 : vector<1x200xf32> to vector<2x200xf32>
    %69 = arith.addf %66, %68 : vector<2x200xf32>
    %cst_40 = arith.constant 0.000000e+00 : f32
    %70 = vector.broadcast %cst_40 : f32 to vector<2x200xf32>
    %71 = arith.maximumf %69, %70 : vector<2x200xf32>
    %cst_41 = arith.constant dense<0.000000e+00> : vector<2xf32>
    %72 = vector.multi_reduction <add>, %71, %cst_41 [1] : vector<2x200xf32> to vector<2xf32>
    %73 = vector.shape_cast %72 : vector<2xf32> to vector<2x1xf32>
    %cst_42 = arith.constant 2.000000e+02 : f32
    %74 = vector.broadcast %cst_42 : f32 to vector<2x1xf32>
    %75 = arith.divf %73, %74 : vector<2x1xf32>
    %76 = vector.broadcast %75 : vector<2x1xf32> to vector<2x200xf32>
    %77 = arith.subf %71, %76 : vector<2x200xf32>
    %78 = arith.mulf %77, %77 : vector<2x200xf32>
    %cst_43 = arith.constant dense<0.000000e+00> : vector<2xf32>
    %79 = vector.multi_reduction <add>, %78, %cst_43 [1] : vector<2x200xf32> to vector<2xf32>
    %80 = vector.shape_cast %79 : vector<2xf32> to vector<2x1xf32>
    %cst_44 = arith.constant 2.000000e+02 : f32
    %81 = vector.broadcast %cst_44 : f32 to vector<2x1xf32>
    %82 = arith.divf %80, %81 : vector<2x1xf32>
    %cst_45 = arith.constant 9.99999974E-6 : f32
    %83 = vector.broadcast %cst_45 : f32 to vector<2x1xf32>
    %84 = arith.addf %82, %83 : vector<2x1xf32>
    %85 = math.rsqrt %84 : vector<2x1xf32>
    %86 = vector.broadcast %85 : vector<2x1xf32> to vector<2x200xf32>
    %87 = arith.mulf %77, %86 : vector<2x200xf32>
    %c0_46 = arith.constant 0 : index
    %c0_47 = arith.constant 0 : index
    %88 = vector.load %arg14[%c0_46, %c0_47] : memref<1x200xf32, #tpu.memory_space<vmem>>, vector<1x200xf32>
    %89 = vector.broadcast %88 : vector<1x200xf32> to vector<2x200xf32>
    %90 = arith.mulf %87, %89 : vector<2x200xf32>
    %c0_48 = arith.constant 0 : index
    %c0_49 = arith.constant 0 : index
    %91 = vector.load %arg15[%c0_48, %c0_49] : memref<1x200xf32, #tpu.memory_space<vmem>>, vector<1x200xf32>
    %92 = vector.broadcast %91 : vector<1x200xf32> to vector<2x200xf32>
    %93 = arith.addf %90, %92 : vector<2x200xf32>
    %c0_50 = arith.constant 0 : index
    %c0_51 = arith.constant 0 : index
    %94 = vector.load %arg16[%c0_50, %c0_51] : memref<1x200xf32, #tpu.memory_space<vmem>>, vector<1x200xf32>
    %95 = vector.broadcast %94 : vector<1x200xf32> to vector<2x200xf32>
    %96 = arith.mulf %93, %95 : vector<2x200xf32>
    %cst_52 = arith.constant dense<0.000000e+00> : vector<2xf32>
    %97 = vector.multi_reduction <add>, %96, %cst_52 [1] : vector<2x200xf32> to vector<2xf32>
    %98 = vector.shape_cast %97 : vector<2xf32> to vector<2x1xf32>
    %c0_53 = arith.constant 0 : index
    %c0_54 = arith.constant 0 : index
    %99 = vector.load %arg17[%c0_53, %c0_54] : memref<1x1xf32, #tpu.memory_space<vmem>>, vector<1x1xf32>
    %100 = vector.broadcast %99 : vector<1x1xf32> to vector<2x1xf32>
    %101 = arith.addf %98, %100 : vector<2x1xf32>
    %c0_55 = arith.constant 0 : index
    %c0_56 = arith.constant 0 : index
    %102 = vector.load %arg18[%c0_55, %c0_56] : memref<2x1xf32, #tpu.memory_space<vmem>>, vector<2x1xf32>
    tpu.vector_store %arg18[%c0_55, %c0_56], %101 {strides = array<i32>} : memref<2x1xf32, #tpu.memory_space<vmem>>, vector<2x1xf32>,
    return
  }
  func.func @transform_0(%arg0: i32) -> (i32, i32) {
    %c0_i32 = arith.constant 0 : i32
    %c0_i32_0 = arith.constant 0 : i32
    return %arg0, %c0_i32 : i32, i32
  }
  func.func @transform_1(%arg0: i32) -> (i32, i32) {
    %c0_i32 = arith.constant 0 : i32
    %c0_i32_0 = arith.constant 0 : i32
    return %arg0, %c0_i32 : i32, i32
  }
  func.func @transform_2(%arg0: i32) -> (i32, i32) {
    %c0_i32 = arith.constant 0 : i32
    %c0_i32_0 = arith.constant 0 : i32
    %c0_i32_1 = arith.constant 0 : i32
    return %c0_i32, %c0_i32_0 : i32, i32
  }
  func.func @transform_3(%arg0: i32) -> (i32, i32) {
    %c0_i32 = arith.constant 0 : i32
    %c0_i32_0 = arith.constant 0 : i32
    %c0_i32_1 = arith.constant 0 : i32
    return %c0_i32, %c0_i32_0 : i32, i32
  }
  func.func @transform_4(%arg0: i32) -> (i32, i32) {
    %c0_i32 = arith.constant 0 : i32
    %c0_i32_0 = arith.constant 0 : i32
    %c0_i32_1 = arith.constant 0 : i32
    return %c0_i32, %c0_i32_0 : i32, i32
  }
  func.func @transform_5(%arg0: i32) -> (i32, i32) {
    %c0_i32 = arith.constant 0 : i32
    %c0_i32_0 = arith.constant 0 : i32
    %c0_i32_1 = arith.constant 0 : i32
    return %c0_i32, %c0_i32_0 : i32, i32
  }
  func.func @transform_6(%arg0: i32) -> (i32, i32) {
    %c0_i32 = arith.constant 0 : i32
    %c0_i32_0 = arith.constant 0 : i32
    %c0_i32_1 = arith.constant 0 : i32
    return %c0_i32, %c0_i32_0 : i32, i32
  }
  func.func @transform_7(%arg0: i32) -> (i32, i32) {
    %c0_i32 = arith.constant 0 : i32
    %c0_i32_0 = arith.constant 0 : i32
    %c0_i32_1 = arith.constant 0 : i32
    return %c0_i32, %c0_i32_0 : i32, i32
  }
  func.func @transform_8(%arg0: i32) -> (i32, i32) {
    %c0_i32 = arith.constant 0 : i32
    %c0_i32_0 = arith.constant 0 : i32
    %c0_i32_1 = arith.constant 0 : i32
    return %c0_i32, %c0_i32_0 : i32, i32
  }
  func.func @transform_9(%arg0: i32) -> (i32, i32) {
    %c0_i32 = arith.constant 0 : i32
    %c0_i32_0 = arith.constant 0 : i32
    %c0_i32_1 = arith.constant 0 : i32
    return %c0_i32, %c0_i32_0 : i32, i32
  }
  func.func @transform_10(%arg0: i32) -> (i32, i32) {
    %c0_i32 = arith.constant 0 : i32
    %c0_i32_0 = arith.constant 0 : i32
    %c0_i32_1 = arith.constant 0 : i32
    return %c0_i32, %c0_i32_0 : i32, i32
  }
  func.func @transform_11(%arg0: i32) -> (i32, i32) {
    %c0_i32 = arith.constant 0 : i32
    %c0_i32_0 = arith.constant 0 : i32
    %c0_i32_1 = arith.constant 0 : i32
    return %c0_i32, %c0_i32_0 : i32, i32
  }
  func.func @transform_12(%arg0: i32) -> (i32, i32) {
    %c0_i32 = arith.constant 0 : i32
    %c0_i32_0 = arith.constant 0 : i32
    %c0_i32_1 = arith.constant 0 : i32
    return %c0_i32, %c0_i32_0 : i32, i32
  }
  func.func @transform_13(%arg0: i32) -> (i32, i32) {
    %c0_i32 = arith.constant 0 : i32
    %c0_i32_0 = arith.constant 0 : i32
    %c0_i32_1 = arith.constant 0 : i32
    return %c0_i32, %c0_i32_0 : i32, i32
  }
  func.func @transform_14(%arg0: i32) -> (i32, i32) {
    %c0_i32 = arith.constant 0 : i32
    %c0_i32_0 = arith.constant 0 : i32
    %c0_i32_1 = arith.constant 0 : i32
    return %c0_i32, %c0_i32_0 : i32, i32
  }
  func.func @transform_15(%arg0: i32) -> (i32, i32) {
    %c0_i32 = arith.constant 0 : i32
    %c0_i32_0 = arith.constant 0 : i32
    %c0_i32_1 = arith.constant 0 : i32
    return %c0_i32, %c0_i32_0 : i32, i32
  }
  func.func @transform_16(%arg0: i32) -> (i32, i32) {
    %c0_i32 = arith.constant 0 : i32
    %c0_i32_0 = arith.constant 0 : i32
    %c0_i32_1 = arith.constant 0 : i32
    return %c0_i32, %c0_i32_0 : i32, i32
  }
  func.func @transform_17(%arg0: i32) -> (i32, i32) {
    %c0_i32 = arith.constant 0 : i32
    %c0_i32_0 = arith.constant 0 : i32
    return %arg0, %c0_i32 : i32, i32
  }
}

</mosaic_0001>

<llo_original>
// kernel: q_forward.1
$region0: #{q_forward.1}
  #allocation0 [shape = 'u32[]', space=smem, size = 0x4, offset = 0x4, fixed_abs, tag = 'smem constant byte address 0x4 - core index']
  #allocation1 [shape = 'u32[144,128]{1,0:T(1,128)}', space=vmem, size = 0x12000, scoped, tag = 'internal scratch']
  #allocation2 [shape = 'f32[1,1]{1,0:T(1,128)S(1)}', space=vmem, size = 0x200, scoped, tag = 'scoped memory for q_forward.1']
  %s0 = inlined_call_operand.vmem [shape: bf16[2,16], index: 0, kind: input, shape index: {}]
  %s1 = inlined_call_operand.vmem [shape: bf16[2,8], index: 1, kind: input, shape index: {}]
  %s2 = inlined_call_operand.vmem [shape: bf16[16,500], index: 2, kind: input, shape index: {}]
  %s3 = inlined_call_operand.vmem [shape: bf16[8,500], index: 3, kind: input, shape index: {}]
  %s4 = inlined_call_operand.vmem [shape: f32[1,500], index: 4, kind: input, shape index: {}]
  %s5 = inlined_call_operand.vmem [shape: f32[1,500], index: 5, kind: input, shape index: {}]
  %s6 = inlined_call_operand.vmem [shape: f32[1,500], index: 6, kind: input, shape index: {}]
  %s7 = inlined_call_operand.vmem [shape: bf16[500,400], index: 7, kind: input, shape index: {}]
  %s8 = inlined_call_operand.vmem [shape: f32[1,400], index: 8, kind: input, shape index: {}]
  %s9 = inlined_call_operand.vmem [shape: f32[1,400], index: 9, kind: input, shape index: {}]
  %s10 = inlined_call_operand.vmem [shape: f32[1,400], index: 10, kind: input, shape index: {}]
  %s11 = inlined_call_operand.vmem [shape: bf16[400,200], index: 11, kind: input, shape index: {}]
  %s12 = inlined_call_operand.vmem [shape: f32[1,200], index: 12, kind: input, shape index: {}]
  %s13 = inlined_call_operand.vmem [shape: f32[1,200], index: 13, kind: input, shape index: {}]
  %s14 = inlined_call_operand.vmem [shape: f32[1,200], index: 14, kind: input, shape index: {}]
  %s15 = inlined_call_operand.vmem [shape: f32[1,200], index: 15, kind: input, shape index: {}]
  %s16 = inlined_call_operand.<no memory space> [shape: f32[1,1], index: 16, kind: input, shape index: {}]
  %s17 = inlined_call_operand.vmem [shape: f32[2,1], index: 17, kind: output, shape index: {}]
  %s18 = sld [smem:[#allocation0]]
  $region78: #{q_forward.1} parent=0
    _
  %s20 = ssub.s32 1, %s18
  %s21 = scalar_select 0, %s20, %s18
  %v22 = vstv %s16
  %23 = vst [vmem:[#allocation2] sm:$0x1] %v22
  // Predicated region
  $region2: #{q_forward.1} parent=0 // pred_check
    _
  $region3: #{q_forward.1} parent=0 // pred_check_branch
    %25 = sbr.rel (0) target = $region5
  $region4: #{q_forward.1} parent=0 // pred_region
    _
  $region5: #{q_forward.1} parent=0 // pred_fallthru
    _
  // Predicated region
  $region6: #{q_forward.1} parent=0 // pred_check
    _
  $region7: #{q_forward.1} parent=0 // pred_check_branch
    %27 = sbr.rel (0) target = $region9
  $region8: #{q_forward.1} parent=0 // pred_region
    _
  $region9: #{q_forward.1} parent=0 // pred_fallthru
    _
  // Predicated region
  $region10: #{q_forward.1} parent=0 // pred_check
    _
  $region11: #{q_forward.1} parent=0 // pred_check_branch
    %29 = sbr.rel (0) target = $region13
  $region12: #{q_forward.1} parent=0 // pred_region
    _
  $region13: #{q_forward.1} parent=0 // pred_fallthru
    _
  // Predicated region
  $region14: #{q_forward.1} parent=0 // pred_check
    _
  $region15: #{q_forward.1} parent=0 // pred_check_branch
    %31 = sbr.rel (0) target = $region17
  $region16: #{q_forward.1} parent=0 // pred_region
    _
  $region17: #{q_forward.1} parent=0 // pred_fallthru
    _
  // Predicated region
  $region18: #{q_forward.1} parent=0 // pred_check
    _
  $region19: #{q_forward.1} parent=0 // pred_check_branch
    %33 = sbr.rel (0) target = $region21
  $region20: #{q_forward.1} parent=0 // pred_region
    _
  $region21: #{q_forward.1} parent=0 // pred_fallthru
    _
  // Predicated region
  $region22: #{q_forward.1} parent=0 // pred_check
    _
  $region23: #{q_forward.1} parent=0 // pred_check_branch
    %35 = sbr.rel (0) target = $region25
  $region24: #{q_forward.1} parent=0 // pred_region
    _
  $region25: #{q_forward.1} parent=0 // pred_fallthru
    _
  // Predicated region
  $region26: #{q_forward.1} parent=0 // pred_check
    _
  $region27: #{q_forward.1} parent=0 // pred_check_branch
    %37 = sbr.rel (0) target = $region29
  $region28: #{q_forward.1} parent=0 // pred_region
    _
  $region29: #{q_forward.1} parent=0 // pred_fallthru
    _
  // Predicated region
  $region30: #{q_forward.1} parent=0 // pred_check
    _
  $region31: #{q_forward.1} parent=0 // pred_check_branch
    %39 = sbr.rel (0) target = $region33
  $region32: #{q_forward.1} parent=0 // pred_region
    _
  $region33: #{q_forward.1} parent=0 // pred_fallthru
    _
  // Predicated region
  $region34: #{q_forward.1} parent=0 // pred_check
    _
  $region35: #{q_forward.1} parent=0 // pred_check_branch
    %41 = sbr.rel (0) target = $region37
  $region36: #{q_forward.1} parent=0 // pred_region
    _
  $region37: #{q_forward.1} parent=0 // pred_fallthru
    _
  // Predicated region
  $region38: #{q_forward.1} parent=0 // pred_check
    _
  $region39: #{q_forward.1} parent=0 // pred_check_branch
    %43 = sbr.rel (0) target = $region41
  $region40: #{q_forward.1} parent=0 // pred_region
    _
  $region41: #{q_forward.1} parent=0 // pred_fallthru
    _
  // Predicated region
  $region42: #{q_forward.1} parent=0 // pred_check
    _
  $region43: #{q_forward.1} parent=0 // pred_check_branch
    %45 = sbr.rel (0) target = $region45
  $region44: #{q_forward.1} parent=0 // pred_region
    _
  $region45: #{q_forward.1} parent=0 // pred_fallthru
    _
  // Predicated region
  $region46: #{q_forward.1} parent=0 // pred_check
    _
  $region47: #{q_forward.1} parent=0 // pred_check_branch
    %47 = sbr.rel (0) target = $region49
  $region48: #{q_forward.1} parent=0 // pred_region
    _
  $region49: #{q_forward.1} parent=0 // pred_fallthru
    _
  // Predicated region
  $region50: #{q_forward.1} parent=0 // pred_check
    _
  $region51: #{q_forward.1} parent=0 // pred_check_branch
    %49 = sbr.rel (0) target = $region53
  $region52: #{q_forward.1} parent=0 // pred_region
    _
  $region53: #{q_forward.1} parent=0 // pred_fallthru
    _
  // Predicated region
  $region54: #{q_forward.1} parent=0 // pred_check
    _
  $region55: #{q_forward.1} parent=0 // pred_check_branch
    %51 = sbr.rel (0) target = $region57
  $region56: #{q_forward.1} parent=0 // pred_region
    _
  $region57: #{q_forward.1} parent=0 // pred_fallthru
    _
  // Predicated region
  $region58: #{q_forward.1} parent=0 // pred_check
    _
  $region59: #{q_forward.1} parent=0 // pred_check_branch
    %53 = sbr.rel (0) target = $region61
  $region60: #{q_forward.1} parent=0 // pred_region
    _
  $region61: #{q_forward.1} parent=0 // pred_fallthru
    _
  // Predicated region
  $region62: #{q_forward.1} parent=0 // pred_check
    _
  $region63: #{q_forward.1} parent=0 // pred_check_branch
    %55 = sbr.rel (0) target = $region65
  $region64: #{q_forward.1} parent=0 // pred_region
    _
  $region65: #{q_forward.1} parent=0 // pred_fallthru
    _
  // Predicated region
  $region66: #{q_forward.1} parent=0 // pred_check
    _
  $region67: #{q_forward.1} parent=0 // pred_check_branch
    %57 = sbr.rel (0) target = $region69
  $region68: #{q_forward.1} parent=0 // pred_region
    _
  $region69: #{q_forward.1} parent=0 // pred_fallthru
    _
  %v59 = vld [vmem:[%s0] sm:$0x1]
  %v60 = vld [vmem:[%s2] sm:$0xff]
  %v61 = vld [vmem:[%s2 + $0x8] sm:$0xff]
  %v62 = vld [vmem:[%s2 + $0x10] sm:$0xff]
  %v63 = vld [vmem:[%s2 + $0x18] sm:$0xff]
  %v64 = vld [vmem:[%s1] sm:$0x1]
  %v65 = vld [vmem:[%s3] sm:$0xff]
  %v66 = vld [vmem:[%s3 + $0x8] sm:$0xff]
  %v69 = vunpack.c.l.b16 %v65
  %v70 = vunpack.c.h.b16 %v65
  %v71 = vunpack.c.l.b16 %v66
  %v72 = vunpack.c.h.b16 %v66
  %v73 = vpack.c.b16 %v69, %v69
  %v74 = vpack.c.b16 %v70, %v70
  %v75 = vpack.c.b16 %v71, %v71
  %v76 = vpack.c.b16 %v72, %v72
  %vm77 = vcmask 64512
  %v79 = vsel %vm77, %v64, 0
  %vm81 = vcmask 1043456
  %v83 = vsel %vm81, %v73, 0
  %v86 = vsel %vm81, %v74, 0
  %v89 = vsel %vm81, %v75, 0
  %v92 = vsel %vm81, %v76, 0
  %94 = vmatprep.subr.bf16.mxu0 0
  %95 = vmatpush1.bf16.msra.mxu0 0
  %96 = vmatprep.subr.bf16.mxu0 0
  %97 = vmatpush1.bf16.msra.mxu0 0
  %98 = vmatprep.subr.bf16.mxu0 0
  %99 = vmatpush1.bf16.msra.mxu0 0
  %100 = vmatprep.subr.bf16.mxu0 0
  %101 = vmatpush1.bf16.msra.mxu0 0
  %102 = vmatprep.subr.bf16.mxu0 0
  %103 = vmatpush1.bf16.msra.mxu0 0
  %104 = vmatprep.subr.bf16.mxu0 0
  %105 = vmatpush1.bf16.msra.mxu0 0
  %106 = vmatprep.subr.bf16.mxu0 0
  %107 = vmatpush1.bf16.msra.mxu0 0
  %108 = vmatprep.subr.bf16.mxu0 %v86
  %109 = vmatpush1.bf16.msra.mxu0 %v83
  %110 = vmatprep.subr.bf16.mxu0 0
  %111 = vmatpush2.bf16.msra.mxu0 0
  %112 = vmatprep.subr.bf16.mxu0 0
  %113 = vmatpush2.bf16.msra.mxu0 0
  %114 = vmatprep.subr.bf16.mxu0 0
  %115 = vmatpush2.bf16.msra.mxu0 0
  %116 = vmatprep.subr.bf16.mxu0 0
  %117 = vmatpush2.bf16.msra.mxu0 0
  %118 = vmatprep.subr.bf16.mxu0 0
  %119 = vmatpush2.bf16.msra.mxu0 0
  %120 = vmatprep.subr.bf16.mxu0 0
  %121 = vmatpush2.bf16.msra.mxu0 0
  %122 = vmatprep.subr.bf16.mxu0 0
  %123 = vmatpush2.bf16.msra.mxu0 0
  %124 = vmatprep.subr.bf16.mxu0 0
  %125 = vmatpush2.bf16.msra.mxu0 0
  %126 = vmatprep.mubr.bf16.mxu0 0
  %127 = vmatmul.mubr.bf16.gmra.mxu0 %v79
  %v128 = vpop.f32.mrf.mxu0
  %v129 = vadd.f32 0.0, %v128
  %v130 = vpop.f32.mrf.mxu0
  %v131 = vadd.f32 0.0, %v130
  %v132 = vpop.f32.mrf.mxu0
  %v133 = vpop.f32.mrf.mxu0
  %134 = vdwg.mxu0
  %135 = vmatprep.subr.bf16.mxu0 0
  %136 = vmatpush1.bf16.msra.mxu0 0
  %137 = vmatprep.subr.bf16.mxu0 0
  %138 = vmatpush1.bf16.msra.mxu0 0
  %139 = vmatprep.subr.bf16.mxu0 0
  %140 = vmatpush1.bf16.msra.mxu0 0
  %141 = vmatprep.subr.bf16.mxu0 0
  %142 = vmatpush1.bf16.msra.mxu0 0
  %143 = vmatprep.subr.bf16.mxu0 0
  %144 = vmatpush1.bf16.msra.mxu0 0
  %145 = vmatprep.subr.bf16.mxu0 0
  %146 = vmatpush1.bf16.msra.mxu0 0
  %147 = vmatprep.subr.bf16.mxu0 0
  %148 = vmatpush1.bf16.msra.mxu0 0
  %149 = vmatprep.subr.bf16.mxu0 %v92
  %150 = vmatpush1.bf16.msra.mxu0 %v89
  %151 = vmatprep.subr.bf16.mxu0 0
  %152 = vmatpush2.bf16.msra.mxu0 0
  %153 = vmatprep.subr.bf16.mxu0 0
  %154 = vmatpush2.bf16.msra.mxu0 0
  %155 = vmatprep.subr.bf16.mxu0 0
  %156 = vmatpush2.bf16.msra.mxu0 0
  %157 = vmatprep.subr.bf16.mxu0 0
  %158 = vmatpush2.bf16.msra.mxu0 0
  %159 = vmatprep.subr.bf16.mxu0 0
  %160 = vmatpush2.bf16.msra.mxu0 0
  %161 = vmatprep.subr.bf16.mxu0 0
  %162 = vmatpush2.bf16.msra.mxu0 0
  %163 = vmatprep.subr.bf16.mxu0 0
  %164 = vmatpush2.bf16.msra.mxu0 0
  %165 = vmatprep.subr.bf16.mxu0 0
  %166 = vmatpush2.bf16.msra.mxu0 0
  %167 = vmatprep.mubr.bf16.mxu0 0
  %168 = vmatmul.mubr.bf16.gmra.mxu0 %v79
  %v169 = vpop.f32.mrf.mxu0
  %v170 = vadd.f32 0.0, %v169
  %v171 = vpop.f32.mrf.mxu0
  %v172 = vadd.f32 0.0, %v171
  %v173 = vpop.f32.mrf.mxu0
  %v174 = vpop.f32.mrf.mxu0
  %175 = vdwg.mxu0
  %v180 = vunpack.c.l.b16 %v60
  %v181 = vunpack.c.h.b16 %v60
  %v182 = vunpack.c.l.b16 %v61
  %v183 = vunpack.c.h.b16 %v61
  %v184 = vunpack.c.l.b16 %v62
  %v185 = vunpack.c.h.b16 %v62
  %v186 = vunpack.c.l.b16 %v63
  %v187 = vunpack.c.h.b16 %v63
  %v188 = vpack.c.b16 %v184, %v180
  %v189 = vpack.c.b16 %v185, %v181
  %v190 = vpack.c.b16 %v186, %v182
  %v191 = vpack.c.b16 %v187, %v183
  %vm196 = vcmask 130048
  %v198 = vsel %vm196, %v59, 0
  %200 = vmatprep.subr.bf16.mxu0 0
  %201 = vmatpush1.bf16.msra.mxu0 0
  %202 = vmatprep.subr.bf16.mxu0 0
  %203 = vmatpush1.bf16.msra.mxu0 0
  %204 = vmatprep.subr.bf16.mxu0 0
  %205 = vmatpush1.bf16.msra.mxu0 0
  %206 = vmatprep.subr.bf16.mxu0 0
  %207 = vmatpush1.bf16.msra.mxu0 0
  %208 = vmatprep.subr.bf16.mxu0 0
  %209 = vmatpush1.bf16.msra.mxu0 0
  %210 = vmatprep.subr.bf16.mxu0 0
  %211 = vmatpush1.bf16.msra.mxu0 0
  %212 = vmatprep.subr.bf16.mxu0 0
  %213 = vmatpush1.bf16.msra.mxu0 0
  %214 = vmatprep.subr.bf16.mxu0 %v189
  %215 = vmatpush1.bf16.msra.mxu0 %v188
  %216 = vmatprep.subr.bf16.mxu0 0
  %217 = vmatpush2.bf16.msra.mxu0 0
  %218 = vmatprep.subr.bf16.mxu0 0
  %219 = vmatpush2.bf16.msra.mxu0 0
  %220 = vmatprep.subr.bf16.mxu0 0
  %221 = vmatpush2.bf16.msra.mxu0 0
  %222 = vmatprep.subr.bf16.mxu0 0
  %223 = vmatpush2.bf16.msra.mxu0 0
  %224 = vmatprep.subr.bf16.mxu0 0
  %225 = vmatpush2.bf16.msra.mxu0 0
  %226 = vmatprep.subr.bf16.mxu0 0
  %227 = vmatpush2.bf16.msra.mxu0 0
  %228 = vmatprep.subr.bf16.mxu0 0
  %229 = vmatpush2.bf16.msra.mxu0 0
  %230 = vmatprep.subr.bf16.mxu0 0
  %231 = vmatpush2.bf16.msra.mxu0 0
  %232 = vmatprep.mubr.bf16.mxu0 0
  %233 = vmatmul.mubr.bf16.gmra.mxu0 %v198
  %v234 = vpop.f32.mrf.mxu0
  %v235 = vadd.f32 %v129, %v234
  %v236 = vpop.f32.mrf.mxu0
  %v237 = vadd.f32 %v131, %v236
  %v238 = vpop.f32.mrf.mxu0
  %v239 = vpop.f32.mrf.mxu0
  %240 = vdwg.mxu0
  %241 = vmatprep.subr.bf16.mxu0 0
  %242 = vmatpush1.bf16.msra.mxu0 0
  %243 = vmatprep.subr.bf16.mxu0 0
  %244 = vmatpush1.bf16.msra.mxu0 0
  %245 = vmatprep.subr.bf16.mxu0 0
  %246 = vmatpush1.bf16.msra.mxu0 0
  %247 = vmatprep.subr.bf16.mxu0 0
  %248 = vmatpush1.bf16.msra.mxu0 0
  %249 = vmatprep.subr.bf16.mxu0 0
  %250 = vmatpush1.bf16.msra.mxu0 0
  %251 = vmatprep.subr.bf16.mxu0 0
  %252 = vmatpush1.bf16.msra.mxu0 0
  %253 = vmatprep.subr.bf16.mxu0 0
  %254 = vmatpush1.bf16.msra.mxu0 0
  %255 = vmatprep.subr.bf16.mxu0 %v191
  %256 = vmatpush1.bf16.msra.mxu0 %v190
  %257 = vmatprep.subr.bf16.mxu0 0
  %258 = vmatpush2.bf16.msra.mxu0 0
  %259 = vmatprep.subr.bf16.mxu0 0
  %260 = vmatpush2.bf16.msra.mxu0 0
  %261 = vmatprep.subr.bf16.mxu0 0
  %262 = vmatpush2.bf16.msra.mxu0 0
  %263 = vmatprep.subr.bf16.mxu0 0
  %264 = vmatpush2.bf16.msra.mxu0 0
  %265 = vmatprep.subr.bf16.mxu0 0
  %266 = vmatpush2.bf16.msra.mxu0 0
  %267 = vmatprep.subr.bf16.mxu0 0
  %268 = vmatpush2.bf16.msra.mxu0 0
  %269 = vmatprep.subr.bf16.mxu0 0
  %270 = vmatpush2.bf16.msra.mxu0 0
  %271 = vmatprep.subr.bf16.mxu0 0
  %272 = vmatpush2.bf16.msra.mxu0 0
  %273 = vmatprep.mubr.bf16.mxu0 0
  %274 = vmatmul.mubr.bf16.gmra.mxu0 %v198
  %v275 = vpop.f32.mrf.mxu0
  %v276 = vadd.f32 %v170, %v275
  %v277 = vpop.f32.mrf.mxu0
  %v278 = vadd.f32 %v172, %v277
  %v279 = vpop.f32.mrf.mxu0
  %v280 = vpop.f32.mrf.mxu0
  %281 = vdwg.mxu0
  %v282 = vld [vmem:[%s4] sm:$0xf]
  %v284 = vlaneseq
  %v285 = vshrl.u32 %v284, 7
  %v286 = vsub.s32 0, %v285
  %v287 = vrot.slane %v282, %v286
  %v288 = vlaneseq
  %v289 = vshrl.u32 %v288, 7
  %v290 = vsub.s32 1, %v289
  %v291 = vrot.slane %v282, %v290
  %v292 = vlaneseq
  %v293 = vshrl.u32 %v292, 7
  %v294 = vsub.s32 2, %v293
  %v295 = vrot.slane %v282, %v294
  %v296 = vlaneseq
  %v297 = vshrl.u32 %v296, 7
  %v298 = vsub.s32 3, %v297
  %v299 = vrot.slane %v282, %v298
  %v304 = vadd.f32 %v235, %v287
  %v305 = vadd.f32 %v237, %v291
  %v306 = vadd.f32 %v276, %v295
  %v307 = vadd.f32 %v278, %v299
  %v308 = vmax.f32 %v304, 0.0
  %v309 = vmax.f32 %v305, 0.0
  %v310 = vmax.f32 %v306, 0.0
  %v311 = vmax.f32 %v307, 0.0
  %vm312 = vcmask 1041408
  %v313 = vsel %vm312, %v308, 0.0
  %v314 = vsel %vm312, %v309, 0.0
  %v315 = vadd.f32 %v313, %v314
  %v316 = vsel %vm312, %v310, 0.0
  %v317 = vadd.f32 %v315, %v316
  %vm318 = vcmask 943104
  %v319 = vsel %vm318, %v311, 0.0
  %v320 = vadd.f32 %v317, %v319
  %321 = vadd.xlane.f32.xlu0 %v320
  %v322 = vpop.xlane.xlu0 %321
  %v323 = vrcp.pop 500.0
  %v324 = vmul.f32 %v322, %v323
  %v325 = vsub.f32 %v308, %v324
  %v326 = vsub.f32 %v309, %v324
  %v327 = vsub.f32 %v310, %v324
  %v328 = vsub.f32 %v311, %v324
  %v329 = vmul.f32 %v325, %v325
  %v330 = vmul.f32 %v326, %v326
  %v331 = vmul.f32 %v327, %v327
  %v332 = vmul.f32 %v328, %v328
  %v333 = vsel %vm312, %v329, 0.0
  %v334 = vsel %vm312, %v330, 0.0
  %v335 = vadd.f32 %v333, %v334
  %v336 = vsel %vm312, %v331, 0.0
  %v337 = vadd.f32 %v335, %v336
  %v338 = vsel %vm318, %v332, 0.0
  %v339 = vadd.f32 %v337, %v338
  %340 = vadd.xlane.f32.xlu0 %v339
  %v341 = vpop.xlane.xlu0 %340
  %v342 = vmul.f32 %v341, %v323
  %v343 = vadd.f32 %v342, 1e-05
  %v344 = vrsqrt.pop %v343
  %v345 = vmul.f32 %v325, %v344
  %v346 = vmul.f32 %v326, %v344
  %v347 = vmul.f32 %v327, %v344
  %v348 = vmul.f32 %v328, %v344
  %v349 = vld [vmem:[%s5] sm:$0xf]
  %v351 = vlaneseq
  %v352 = vshrl.u32 %v351, 7
  %v353 = vsub.s32 0, %v352
  %v354 = vrot.slane %v349, %v353
  %v355 = vlaneseq
  %v356 = vshrl.u32 %v355, 7
  %v357 = vsub.s32 1, %v356
  %v358 = vrot.slane %v349, %v357
  %v359 = vlaneseq
  %v360 = vshrl.u32 %v359, 7
  %v361 = vsub.s32 2, %v360
  %v362 = vrot.slane %v349, %v361
  %v363 = vlaneseq
  %v364 = vshrl.u32 %v363, 7
  %v365 = vsub.s32 3, %v364
  %v366 = vrot.slane %v349, %v365
  %v371 = vmul.f32 %v345, %v354
  %v372 = vmul.f32 %v346, %v358
  %v373 = vmul.f32 %v347, %v362
  %v374 = vmul.f32 %v348, %v366
  %v375 = vld [vmem:[%s6] sm:$0xf]
  %v377 = vlaneseq
  %v378 = vshrl.u32 %v377, 7
  %v379 = vsub.s32 0, %v378
  %v380 = vrot.slane %v375, %v379
  %v381 = vlaneseq
  %v382 = vshrl.u32 %v381, 7
  %v383 = vsub.s32 1, %v382
  %v384 = vrot.slane %v375, %v383
  %v385 = vlaneseq
  %v386 = vshrl.u32 %v385, 7
  %v387 = vsub.s32 2, %v386
  %v388 = vrot.slane %v375, %v387
  %v389 = vlaneseq
  %v390 = vshrl.u32 %v389, 7
  %v391 = vsub.s32 3, %v390
  %v392 = vrot.slane %v375, %v391
  %v397 = vadd.f32 %v371, %v380
  %v398 = vadd.f32 %v372, %v384
  %v399 = vadd.f32 %v373, %v388
  %v400 = vadd.f32 %v374, %v392
  %v401 = vld [vmem:[%s7] sm:$0xff]
  %v402 = vld [vmem:[%s7 + $0x8] sm:$0xff]
  %v403 = vld [vmem:[%s7 + $0x10] sm:$0xff]
  %v404 = vld [vmem:[%s7 + $0x18] sm:$0xff]
  %v405 = vld [vmem:[%s7 + $0x20] sm:$0xff]
  %v406 = vld [vmem:[%s7 + $0x28] sm:$0xff]
  %v407 = vld [vmem:[%s7 + $0x30] sm:$0xff]
  %v408 = vld [vmem:[%s7 + $0x38] sm:$0xff]
  %v409 = vld [vmem:[%s7 + $0x40] sm:$0xff]
  %v410 = vld [vmem:[%s7 + $0x48] sm:$0xff]
  %v411 = vld [vmem:[%s7 + $0x50] sm:$0xff]
  %v412 = vld [vmem:[%s7 + $0x58] sm:$0xff]
  %v413 = vld [vmem:[%s7 + $0x60] sm:$0xff]
  %v414 = vld [vmem:[%s7 + $0x68] sm:$0xff]
  %v415 = vld [vmem:[%s7 + $0x70] sm:$0xff]
  %v416 = vld [vmem:[%s7 + $0x78] sm:$0xff]
  %v417 = vld [vmem:[%s7 + $0x80] sm:$0xff]
  %v418 = vld [vmem:[%s7 + $0x88] sm:$0xff]
  %v419 = vld [vmem:[%s7 + $0x90] sm:$0xff]
  %v420 = vld [vmem:[%s7 + $0x98] sm:$0xff]
  %v421 = vld [vmem:[%s7 + $0xa0] sm:$0xff]
  %v422 = vld [vmem:[%s7 + $0xa8] sm:$0xff]
  %v423 = vld [vmem:[%s7 + $0xb0] sm:$0xff]
  %v424 = vld [vmem:[%s7 + $0xb8] sm:$0xff]
  %v425 = vld [vmem:[%s7 + $0xc0] sm:$0xff]
  %v426 = vld [vmem:[%s7 + $0xc8] sm:$0xff]
  %v427 = vld [vmem:[%s7 + $0xd0] sm:$0xff]
  %v428 = vld [vmem:[%s7 + $0xd8] sm:$0xff]
  %v429 = vld [vmem:[%s7 + $0xe0] sm:$0xff]
  %v430 = vld [vmem:[%s7 + $0xe8] sm:$0xff]
  %v431 = vld [vmem:[%s7 + $0xf0] sm:$0xff]
  %v432 = vld [vmem:[%s7 + $0xf8] sm:$0xff]
  %v433 = vld [vmem:[%s7 + $0x100] sm:$0xff]
  %v434 = vld [vmem:[%s7 + $0x108] sm:$0xff]
  %v435 = vld [vmem:[%s7 + $0x110] sm:$0xff]
  %v436 = vld [vmem:[%s7 + $0x118] sm:$0xff]
  %v437 = vld [vmem:[%s7 + $0x120] sm:$0xff]
  %v438 = vld [vmem:[%s7 + $0x128] sm:$0xff]
  %v439 = vld [vmem:[%s7 + $0x130] sm:$0xff]
  %v440 = vld [vmem:[%s7 + $0x138] sm:$0xff]
  %v441 = vld [vmem:[%s7 + $0x140] sm:$0xff]
  %v442 = vld [vmem:[%s7 + $0x148] sm:$0xff]
  %v443 = vld [vmem:[%s7 + $0x150] sm:$0xff]
  %v444 = vld [vmem:[%s7 + $0x158] sm:$0xff]
  %v445 = vld [vmem:[%s7 + $0x160] sm:$0xff]
  %v446 = vld [vmem:[%s7 + $0x168] sm:$0xff]
  %v447 = vld [vmem:[%s7 + $0x170] sm:$0xff]
  %v448 = vld [vmem:[%s7 + $0x178] sm:$0xff]
  %v449 = vld [vmem:[%s7 + $0x180] sm:$0xff]
  %v450 = vld [vmem:[%s7 + $0x188] sm:$0xff]
  %v451 = vld [vmem:[%s7 + $0x190] sm:$0xff]
  %v452 = vld [vmem:[%s7 + $0x198] sm:$0xff]
  %v453 = vld [vmem:[%s7 + $0x1a0] sm:$0xff]
  %v454 = vld [vmem:[%s7 + $0x1a8] sm:$0xff]
  %v455 = vld [vmem:[%s7 + $0x1b0] sm:$0xff]
  %v456 = vld [vmem:[%s7 + $0x1b8] sm:$0xff]
  %v457 = vld [vmem:[%s7 + $0x1c0] sm:$0xff]
  %v458 = vld [vmem:[%s7 + $0x1c8] sm:$0xff]
  %v459 = vld [vmem:[%s7 + $0x1d0] sm:$0xff]
  %v460 = vld [vmem:[%s7 + $0x1d8] sm:$0xff]
  %v461 = vld [vmem:[%s7 + $0x1e0] sm:$0xff]
  %v462 = vld [vmem:[%s7 + $0x1e8] sm:$0xff]
  %v463 = vld [vmem:[%s7 + $0x1f0] sm:$0xff]
  %v464 = vld [vmem:[%s7 + $0x1f8] sm:$0xff]
  %v465 = vld [vmem:[%s7 + $0x200] sm:$0xff]
  %v466 = vld [vmem:[%s7 + $0x208] sm:$0xff]
  %v467 = vld [vmem:[%s7 + $0x210] sm:$0xff]
  %v468 = vld [vmem:[%s7 + $0x218] sm:$0xff]
  %v469 = vld [vmem:[%s7 + $0x220] sm:$0xff]
  %v470 = vld [vmem:[%s7 + $0x228] sm:$0xff]
  %v471 = vld [vmem:[%s7 + $0x230] sm:$0xff]
  %v472 = vld [vmem:[%s7 + $0x238] sm:$0xff]
  %v473 = vld [vmem:[%s7 + $0x240] sm:$0xff]
  %v474 = vld [vmem:[%s7 + $0x248] sm:$0xff]
  %v475 = vld [vmem:[%s7 + $0x250] sm:$0xff]
  %v476 = vld [vmem:[%s7 + $0x258] sm:$0xff]
  %v477 = vld [vmem:[%s7 + $0x260] sm:$0xff]
  %v478 = vld [vmem:[%s7 + $0x268] sm:$0xff]
  %v479 = vld [vmem:[%s7 + $0x270] sm:$0xff]
  %v480 = vld [vmem:[%s7 + $0x278] sm:$0xff]
  %v481 = vld [vmem:[%s7 + $0x280] sm:$0xff]
  %v482 = vld [vmem:[%s7 + $0x288] sm:$0xff]
  %v483 = vld [vmem:[%s7 + $0x290] sm:$0xff]
  %v484 = vld [vmem:[%s7 + $0x298] sm:$0xff]
  %v485 = vld [vmem:[%s7 + $0x2a0] sm:$0xff]
  %v486 = vld [vmem:[%s7 + $0x2a8] sm:$0xff]
  %v487 = vld [vmem:[%s7 + $0x2b0] sm:$0xff]
  %v488 = vld [vmem:[%s7 + $0x2b8] sm:$0xff]
  %v489 = vld [vmem:[%s7 + $0x2c0] sm:$0xff]
  %v490 = vld [vmem:[%s7 + $0x2c8] sm:$0xff]
  %v491 = vld [vmem:[%s7 + $0x2d0] sm:$0xff]
  %v492 = vld [vmem:[%s7 + $0x2d8] sm:$0xff]
  %v493 = vld [vmem:[%s7 + $0x2e0] sm:$0xff]
  %v494 = vld [vmem:[%s7 + $0x2e8] sm:$0xff]
  %v495 = vld [vmem:[%s7 + $0x2f0] sm:$0xff]
  %v496 = vld [vmem:[%s7 + $0x2f8] sm:$0xff]
  %v497 = vld [vmem:[%s7 + $0x300] sm:$0xff]
  %v498 = vld [vmem:[%s7 + $0x308] sm:$0xff]
  %v499 = vld [vmem:[%s7 + $0x310] sm:$0xff]
  %v500 = vld [vmem:[%s7 + $0x318] sm:$0xff]
  %v501 = vld [vmem:[%s7 + $0x320] sm:$0xff]
  %v502 = vld [vmem:[%s7 + $0x328] sm:$0xff]
  %v503 = vld [vmem:[%s7 + $0x330] sm:$0xff]
  %v504 = vld [vmem:[%s7 + $0x338] sm:$0xff]
  %v505 = vld [vmem:[%s7 + $0x340] sm:$0xff]
  %v506 = vld [vmem:[%s7 + $0x348] sm:$0xff]
  %v507 = vld [vmem:[%s7 + $0x350] sm:$0xff]
  %v508 = vld [vmem:[%s7 + $0x358] sm:$0xff]
  %v509 = vld [vmem:[%s7 + $0x360] sm:$0xff]
  %v510 = vld [vmem:[%s7 + $0x368] sm:$0xff]
  %v511 = vld [vmem:[%s7 + $0x370] sm:$0xff]
  %v512 = vld [vmem:[%s7 + $0x378] sm:$0xff]
  %v513 = vld [vmem:[%s7 + $0x380] sm:$0xff]
  %v514 = vld [vmem:[%s7 + $0x388] sm:$0xff]
  %v515 = vld [vmem:[%s7 + $0x390] sm:$0xff]
  %v516 = vld [vmem:[%s7 + $0x398] sm:$0xff]
  %v517 = vld [vmem:[%s7 + $0x3a0] sm:$0xff]
  %v518 = vld [vmem:[%s7 + $0x3a8] sm:$0xff]
  %v519 = vld [vmem:[%s7 + $0x3b0] sm:$0xff]
  %v520 = vld [vmem:[%s7 + $0x3b8] sm:$0xff]
  %v521 = vld [vmem:[%s7 + $0x3c0] sm:$0xff]
  %v522 = vld [vmem:[%s7 + $0x3c8] sm:$0xff]
  %v523 = vld [vmem:[%s7 + $0x3d0] sm:$0xff]
  %v524 = vld [vmem:[%s7 + $0x3d8] sm:$0xff]
  %v525 = vld [vmem:[%s7 + $0x3e0] sm:$0x33]
  %v526 = vld [vmem:[%s7 + $0x3e8] sm:$0x33]
  %v527 = vpack.c.bf16 %v397, %v397
  %v528 = vpack.c.bf16 %v398, %v398
  %v529 = vpack.c.bf16 %v399, %v399
  %v530 = vpack.c.bf16 %v400, %v400
  %v531 = vld [vmem:[%s8] sm:$0xf]
  %v533 = vlaneseq
  %v534 = vshrl.u32 %v533, 7
  %v535 = vsub.s32 0, %v534
  %v536 = vrot.slane %v531, %v535
  %v537 = vlaneseq
  %v538 = vshrl.u32 %v537, 7
  %v539 = vsub.s32 1, %v538
  %v540 = vrot.slane %v531, %v539
  %v541 = vlaneseq
  %v542 = vshrl.u32 %v541, 7
  %v543 = vsub.s32 2, %v542
  %v544 = vrot.slane %v531, %v543
  %v545 = vlaneseq
  %v546 = vshrl.u32 %v545, 7
  %v547 = vsub.s32 3, %v546
  %v548 = vrot.slane %v531, %v547
  %v679 = vunpack.c.l.b16 %v401
  %v680 = vunpack.c.h.b16 %v401
  %v681 = vunpack.c.l.b16 %v402
  %v682 = vunpack.c.h.b16 %v402
  %v683 = vunpack.c.l.b16 %v403
  %v684 = vunpack.c.h.b16 %v403
  %v685 = vunpack.c.l.b16 %v404
  %v686 = vunpack.c.h.b16 %v404
  %v687 = vunpack.c.l.b16 %v405
  %v688 = vunpack.c.h.b16 %v405
  %v689 = vunpack.c.l.b16 %v406
  %v690 = vunpack.c.h.b16 %v406
  %v691 = vunpack.c.l.b16 %v407
  %v692 = vunpack.c.h.b16 %v407
  %v693 = vunpack.c.l.b16 %v408
  %v694 = vunpack.c.h.b16 %v408
  %v695 = vunpack.c.l.b16 %v409
  %v696 = vunpack.c.h.b16 %v409
  %v697 = vunpack.c.l.b16 %v410
  %v698 = vunpack.c.h.b16 %v410
  %v699 = vunpack.c.l.b16 %v411
  %v700 = vunpack.c.h.b16 %v411
  %v701 = vunpack.c.l.b16 %v412
  %v702 = vunpack.c.h.b16 %v412
  %v703 = vunpack.c.l.b16 %v413
  %v704 = vunpack.c.h.b16 %v413
  %v705 = vunpack.c.l.b16 %v414
  %v706 = vunpack.c.h.b16 %v414
  %v707 = vunpack.c.l.b16 %v415
  %v708 = vunpack.c.h.b16 %v415
  %v709 = vunpack.c.l.b16 %v416
  %v710 = vunpack.c.h.b16 %v416
  %v711 = vunpack.c.l.b16 %v417
  %v712 = vunpack.c.h.b16 %v417
  %v713 = vunpack.c.l.b16 %v418
  %v714 = vunpack.c.h.b16 %v418
  %v715 = vunpack.c.l.b16 %v419
  %v716 = vunpack.c.h.b16 %v419
  %v717 = vunpack.c.l.b16 %v420
  %v718 = vunpack.c.h.b16 %v420
  %v719 = vunpack.c.l.b16 %v421
  %v720 = vunpack.c.h.b16 %v421
  %v721 = vunpack.c.l.b16 %v422
  %v722 = vunpack.c.h.b16 %v422
  %v723 = vunpack.c.l.b16 %v423
  %v724 = vunpack.c.h.b16 %v423
  %v725 = vunpack.c.l.b16 %v424
  %v726 = vunpack.c.h.b16 %v424
  %v727 = vunpack.c.l.b16 %v425
  %v728 = vunpack.c.h.b16 %v425
  %v729 = vunpack.c.l.b16 %v426
  %v730 = vunpack.c.h.b16 %v426
  %v731 = vunpack.c.l.b16 %v427
  %v732 = vunpack.c.h.b16 %v427
  %v733 = vunpack.c.l.b16 %v428
  %v734 = vunpack.c.h.b16 %v428
  %v735 = vunpack.c.l.b16 %v429
  %v736 = vunpack.c.h.b16 %v429
  %v737 = vunpack.c.l.b16 %v430
  %v738 = vunpack.c.h.b16 %v430
  %v739 = vunpack.c.l.b16 %v431
  %v740 = vunpack.c.h.b16 %v431
  %v741 = vunpack.c.l.b16 %v432
  %v742 = vunpack.c.h.b16 %v432
  %v743 = vunpack.c.l.b16 %v433
  %v744 = vunpack.c.h.b16 %v433
  %v745 = vunpack.c.l.b16 %v434
  %v746 = vunpack.c.h.b16 %v434
  %v747 = vunpack.c.l.b16 %v435
  %v748 = vunpack.c.h.b16 %v435
  %v749 = vunpack.c.l.b16 %v436
  %v750 = vunpack.c.h.b16 %v436
  %v751 = vunpack.c.l.b16 %v437
  %v752 = vunpack.c.h.b16 %v437
  %v753 = vunpack.c.l.b16 %v438
  %v754 = vunpack.c.h.b16 %v438
  %v755 = vunpack.c.l.b16 %v439
  %v756 = vunpack.c.h.b16 %v439
  %v757 = vunpack.c.l.b16 %v440
  %v758 = vunpack.c.h.b16 %v440
  %v759 = vunpack.c.l.b16 %v441
  %v760 = vunpack.c.h.b16 %v441
  %v761 = vunpack.c.l.b16 %v442
  %v762 = vunpack.c.h.b16 %v442
  %v763 = vunpack.c.l.b16 %v443
  %v764 = vunpack.c.h.b16 %v443
  %v765 = vunpack.c.l.b16 %v444
  %v766 = vunpack.c.h.b16 %v444
  %v767 = vunpack.c.l.b16 %v445
  %v768 = vunpack.c.h.b16 %v445
  %v769 = vunpack.c.l.b16 %v446
  %v770 = vunpack.c.h.b16 %v446
  %v771 = vunpack.c.l.b16 %v447
  %v772 = vunpack.c.h.b16 %v447
  %v773 = vunpack.c.l.b16 %v448
  %v774 = vunpack.c.h.b16 %v448
  %v775 = vunpack.c.l.b16 %v449
  %v776 = vunpack.c.h.b16 %v449
  %v777 = vunpack.c.l.b16 %v450
  %v778 = vunpack.c.h.b16 %v450
  %v779 = vunpack.c.l.b16 %v451
  %v780 = vunpack.c.h.b16 %v451
  %v781 = vunpack.c.l.b16 %v452
  %v782 = vunpack.c.h.b16 %v452
  %v783 = vunpack.c.l.b16 %v453
  %v784 = vunpack.c.h.b16 %v453
  %v785 = vunpack.c.l.b16 %v454
  %v786 = vunpack.c.h.b16 %v454
  %v787 = vunpack.c.l.b16 %v455
  %v788 = vunpack.c.h.b16 %v455
  %v789 = vunpack.c.l.b16 %v456
  %v790 = vunpack.c.h.b16 %v456
  %v791 = vunpack.c.l.b16 %v457
  %v792 = vunpack.c.h.b16 %v457
  %v793 = vunpack.c.l.b16 %v458
  %v794 = vunpack.c.h.b16 %v458
  %v795 = vunpack.c.l.b16 %v459
  %v796 = vunpack.c.h.b16 %v459
  %v797 = vunpack.c.l.b16 %v460
  %v798 = vunpack.c.h.b16 %v460
  %v799 = vunpack.c.l.b16 %v461
  %v800 = vunpack.c.h.b16 %v461
  %v801 = vunpack.c.l.b16 %v462
  %v802 = vunpack.c.h.b16 %v462
  %v803 = vunpack.c.l.b16 %v463
  %v804 = vunpack.c.h.b16 %v463
  %v805 = vunpack.c.l.b16 %v464
  %v806 = vunpack.c.h.b16 %v464
  %v807 = vunpack.c.l.b16 %v465
  %v808 = vunpack.c.h.b16 %v465
  %v809 = vunpack.c.l.b16 %v466
  %v810 = vunpack.c.h.b16 %v466
  %v811 = vunpack.c.l.b16 %v467
  %v812 = vunpack.c.h.b16 %v467
  %v813 = vunpack.c.l.b16 %v468
  %v814 = vunpack.c.h.b16 %v468
  %v815 = vunpack.c.l.b16 %v469
  %v816 = vunpack.c.h.b16 %v469
  %v817 = vunpack.c.l.b16 %v470
  %v818 = vunpack.c.h.b16 %v470
  %v819 = vunpack.c.l.b16 %v471
  %v820 = vunpack.c.h.b16 %v471
  %v821 = vunpack.c.l.b16 %v472
  %v822 = vunpack.c.h.b16 %v472
  %v823 = vunpack.c.l.b16 %v473
  %v824 = vunpack.c.h.b16 %v473
  %v825 = vunpack.c.l.b16 %v474
  %v826 = vunpack.c.h.b16 %v474
  %v827 = vunpack.c.l.b16 %v475
  %v828 = vunpack.c.h.b16 %v475
  %v829 = vunpack.c.l.b16 %v476
  %v830 = vunpack.c.h.b16 %v476
  %v831 = vunpack.c.l.b16 %v477
  %v832 = vunpack.c.h.b16 %v477
  %v833 = vunpack.c.l.b16 %v478
  %v834 = vunpack.c.h.b16 %v478
  %v835 = vunpack.c.l.b16 %v479
  %v836 = vunpack.c.h.b16 %v479
  %v837 = vunpack.c.l.b16 %v480
  %v838 = vunpack.c.h.b16 %v480
  %v839 = vunpack.c.l.b16 %v481
  %v840 = vunpack.c.h.b16 %v481
  %v841 = vunpack.c.l.b16 %v482
  %v842 = vunpack.c.h.b16 %v482
  %v843 = vunpack.c.l.b16 %v483
  %v844 = vunpack.c.h.b16 %v483
  %v845 = vunpack.c.l.b16 %v484
  %v846 = vunpack.c.h.b16 %v484
  %v847 = vunpack.c.l.b16 %v485
  %v848 = vunpack.c.h.b16 %v485
  %v849 = vunpack.c.l.b16 %v486
  %v850 = vunpack.c.h.b16 %v486
  %v851 = vunpack.c.l.b16 %v487
  %v852 = vunpack.c.h.b16 %v487
  %v853 = vunpack.c.l.b16 %v488
  %v854 = vunpack.c.h.b16 %v488
  %v855 = vunpack.c.l.b16 %v489
  %v856 = vunpack.c.h.b16 %v489
  %v857 = vunpack.c.l.b16 %v490
  %v858 = vunpack.c.h.b16 %v490
  %v859 = vunpack.c.l.b16 %v491
  %v860 = vunpack.c.h.b16 %v491
  %v861 = vunpack.c.l.b16 %v492
  %v862 = vunpack.c.h.b16 %v492
  %v863 = vunpack.c.l.b16 %v493
  %v864 = vunpack.c.h.b16 %v493
  %v865 = vunpack.c.l.b16 %v494
  %v866 = vunpack.c.h.b16 %v494
  %v867 = vunpack.c.l.b16 %v495
  %v868 = vunpack.c.h.b16 %v495
  %v869 = vunpack.c.l.b16 %v496
  %v870 = vunpack.c.h.b16 %v496
  %v871 = vunpack.c.l.b16 %v497
  %v872 = vunpack.c.h.b16 %v497
  %v873 = vunpack.c.l.b16 %v498
  %v874 = vunpack.c.h.b16 %v498
  %v875 = vunpack.c.l.b16 %v499
  %v876 = vunpack.c.h.b16 %v499
  %v877 = vunpack.c.l.b16 %v500
  %v878 = vunpack.c.h.b16 %v500
  %v879 = vunpack.c.l.b16 %v501
  %v880 = vunpack.c.h.b16 %v501
  %v881 = vunpack.c.l.b16 %v502
  %v882 = vunpack.c.h.b16 %v502
  %v883 = vunpack.c.l.b16 %v503
  %v884 = vunpack.c.h.b16 %v503
  %v885 = vunpack.c.l.b16 %v504
  %v886 = vunpack.c.h.b16 %v504
  %v887 = vunpack.c.l.b16 %v505
  %v888 = vunpack.c.h.b16 %v505
  %v889 = vunpack.c.l.b16 %v506
  %v890 = vunpack.c.h.b16 %v506
  %v891 = vunpack.c.l.b16 %v507
  %v892 = vunpack.c.h.b16 %v507
  %v893 = vunpack.c.l.b16 %v508
  %v894 = vunpack.c.h.b16 %v508
  %v895 = vunpack.c.l.b16 %v509
  %v896 = vunpack.c.h.b16 %v509
  %v897 = vunpack.c.l.b16 %v510
  %v898 = vunpack.c.h.b16 %v510
  %v899 = vunpack.c.l.b16 %v511
  %v900 = vunpack.c.h.b16 %v511
  %v901 = vunpack.c.l.b16 %v512
  %v902 = vunpack.c.h.b16 %v512
  %v903 = vunpack.c.l.b16 %v513
  %v904 = vunpack.c.h.b16 %v513
  %v905 = vunpack.c.l.b16 %v514
  %v906 = vunpack.c.h.b16 %v514
  %v907 = vunpack.c.l.b16 %v515
  %v908 = vunpack.c.h.b16 %v515
  %v909 = vunpack.c.l.b16 %v516
  %v910 = vunpack.c.h.b16 %v516
  %v911 = vunpack.c.l.b16 %v517
  %v912 = vunpack.c.h.b16 %v517
  %v913 = vunpack.c.l.b16 %v518
  %v914 = vunpack.c.h.b16 %v518
  %v915 = vunpack.c.l.b16 %v519
  %v916 = vunpack.c.h.b16 %v519
  %v917 = vunpack.c.l.b16 %v520
  %v918 = vunpack.c.h.b16 %v520
  %v919 = vunpack.c.l.b16 %v521
  %v920 = vunpack.c.h.b16 %v521
  %v921 = vunpack.c.l.b16 %v522
  %v922 = vunpack.c.h.b16 %v522
  %v923 = vunpack.c.l.b16 %v523
  %v924 = vunpack.c.h.b16 %v523
  %v925 = vunpack.c.l.b16 %v524
  %v926 = vunpack.c.h.b16 %v524
  %v927 = vunpack.c.l.b16 %v525
  %v928 = vunpack.c.h.b16 %v525
  %v929 = vunpack.c.l.b16 %v526
  %v930 = vunpack.c.h.b16 %v526
  %v931 = vpack.c.b16 %v683, %v679
  %v932 = vpack.c.b16 %v684, %v680
  %v933 = vpack.c.b16 %v685, %v681
  %v934 = vpack.c.b16 %v686, %v682
  %v935 = vpack.c.b16 %v691, %v687
  %v936 = vpack.c.b16 %v692, %v688
  %v937 = vpack.c.b16 %v693, %v689
  %v938 = vpack.c.b16 %v694, %v690
  %v939 = vpack.c.b16 %v699, %v695
  %v940 = vpack.c.b16 %v700, %v696
  %v941 = vpack.c.b16 %v701, %v697
  %v942 = vpack.c.b16 %v702, %v698
  %v943 = vpack.c.b16 %v707, %v703
  %v944 = vpack.c.b16 %v708, %v704
  %v945 = vpack.c.b16 %v709, %v705
  %v946 = vpack.c.b16 %v710, %v706
  %v947 = vpack.c.b16 %v715, %v711
  %v948 = vpack.c.b16 %v716, %v712
  %v949 = vpack.c.b16 %v717, %v713
  %v950 = vpack.c.b16 %v718, %v714
  %v951 = vpack.c.b16 %v723, %v719
  %v952 = vpack.c.b16 %v724, %v720
  %v953 = vpack.c.b16 %v725, %v721
  %v954 = vpack.c.b16 %v726, %v722
  %v955 = vpack.c.b16 %v731, %v727
  %v956 = vpack.c.b16 %v732, %v728
  %v957 = vpack.c.b16 %v733, %v729
  %v958 = vpack.c.b16 %v734, %v730
  %v959 = vpack.c.b16 %v739, %v735
  %v960 = vpack.c.b16 %v740, %v736
  %v961 = vpack.c.b16 %v741, %v737
  %v962 = vpack.c.b16 %v742, %v738
  %v963 = vpack.c.b16 %v747, %v743
  %v964 = vpack.c.b16 %v748, %v744
  %v965 = vpack.c.b16 %v749, %v745
  %v966 = vpack.c.b16 %v750, %v746
  %v967 = vpack.c.b16 %v755, %v751
  %v968 = vpack.c.b16 %v756, %v752
  %v969 = vpack.c.b16 %v757, %v753
  %v970 = vpack.c.b16 %v758, %v754
  %v971 = vpack.c.b16 %v763, %v759
  %v972 = vpack.c.b16 %v764, %v760
  %v973 = vpack.c.b16 %v765, %v761
  %v974 = vpack.c.b16 %v766, %v762
  %v975 = vpack.c.b16 %v771, %v767
  %v976 = vpack.c.b16 %v772, %v768
  %v977 = vpack.c.b16 %v773, %v769
  %v978 = vpack.c.b16 %v774, %v770
  %v979 = vpack.c.b16 %v779, %v775
  %v980 = vpack.c.b16 %v780, %v776
  %v981 = vpack.c.b16 %v781, %v777
  %v982 = vpack.c.b16 %v782, %v778
  %v983 = vpack.c.b16 %v787, %v783
  %v984 = vpack.c.b16 %v788, %v784
  %v985 = vpack.c.b16 %v789, %v785
  %v986 = vpack.c.b16 %v790, %v786
  %v987 = vpack.c.b16 %v795, %v791
  %v988 = vpack.c.b16 %v796, %v792
  %v989 = vpack.c.b16 %v797, %v793
  %v990 = vpack.c.b16 %v798, %v794
  %v991 = vpack.c.b16 %v803, %v799
  %v992 = vpack.c.b16 %v804, %v800
  %v993 = vpack.c.b16 %v805, %v801
  %v994 = vpack.c.b16 %v806, %v802
  %v995 = vpack.c.b16 %v811, %v807
  %v996 = vpack.c.b16 %v812, %v808
  %v997 = vpack.c.b16 %v813, %v809
  %v998 = vpack.c.b16 %v814, %v810
  %v999 = vpack.c.b16 %v819, %v815
  %v1000 = vpack.c.b16 %v820, %v816
  %v1001 = vpack.c.b16 %v821, %v817
  %v1002 = vpack.c.b16 %v822, %v818
  %v1003 = vpack.c.b16 %v827, %v823
  %v1004 = vpack.c.b16 %v828, %v824
  %v1005 = vpack.c.b16 %v829, %v825
  %v1006 = vpack.c.b16 %v830, %v826
  %v1007 = vpack.c.b16 %v835, %v831
  %v1008 = vpack.c.b16 %v836, %v832
  %v1009 = vpack.c.b16 %v837, %v833
  %v1010 = vpack.c.b16 %v838, %v834
  %v1011 = vpack.c.b16 %v843, %v839
  %v1012 = vpack.c.b16 %v844, %v840
  %v1013 = vpack.c.b16 %v845, %v841
  %v1014 = vpack.c.b16 %v846, %v842
  %v1015 = vpack.c.b16 %v851, %v847
  %v1016 = vpack.c.b16 %v852, %v848
  %v1017 = vpack.c.b16 %v853, %v849
  %v1018 = vpack.c.b16 %v854, %v850
  %v1019 = vpack.c.b16 %v859, %v855
  %v1020 = vpack.c.b16 %v860, %v856
  %v1021 = vpack.c.b16 %v861, %v857
  %v1022 = vpack.c.b16 %v862, %v858
  %v1023 = vpack.c.b16 %v867, %v863
  %v1024 = vpack.c.b16 %v868, %v864
  %v1025 = vpack.c.b16 %v869, %v865
  %v1026 = vpack.c.b16 %v870, %v866
  %v1027 = vpack.c.b16 %v875, %v871
  %v1028 = vpack.c.b16 %v876, %v872
  %v1029 = vpack.c.b16 %v877, %v873
  %v1030 = vpack.c.b16 %v878, %v874
  %v1031 = vpack.c.b16 %v883, %v879
  %v1032 = vpack.c.b16 %v884, %v880
  %v1033 = vpack.c.b16 %v885, %v881
  %v1034 = vpack.c.b16 %v886, %v882
  %v1035 = vpack.c.b16 %v891, %v887
  %v1036 = vpack.c.b16 %v892, %v888
  %v1037 = vpack.c.b16 %v893, %v889
  %v1038 = vpack.c.b16 %v894, %v890
  %v1039 = vpack.c.b16 %v899, %v895
  %v1040 = vpack.c.b16 %v900, %v896
  %v1041 = vpack.c.b16 %v901, %v897
  %v1042 = vpack.c.b16 %v902, %v898
  %v1043 = vpack.c.b16 %v907, %v903
  %v1044 = vpack.c.b16 %v908, %v904
  %v1045 = vpack.c.b16 %v909, %v905
  %v1046 = vpack.c.b16 %v910, %v906
  %v1047 = vpack.c.b16 %v915, %v911
  %v1048 = vpack.c.b16 %v916, %v912
  %v1049 = vpack.c.b16 %v917, %v913
  %v1050 = vpack.c.b16 %v918, %v914
  %v1051 = vpack.c.b16 %v923, %v919
  %v1052 = vpack.c.b16 %v924, %v920
  %v1053 = vpack.c.b16 %v925, %v921
  %v1054 = vpack.c.b16 %v926, %v922
  %v1055 = vpack.c.b16 %v927, %v927
  %v1056 = vpack.c.b16 %v928, %v928
  %v1057 = vpack.c.b16 %v929, %v929
  %v1058 = vpack.c.b16 %v930, %v930
  %vm1183 = vcmask 949248
  %v1185 = vsel %vm1183, %v530, 0
  %v1188 = vsel %vm312, %v1055, 0
  %v1191 = vsel %vm312, %v1056, 0
  %v1194 = vsel %vm312, %v1057, 0
  %v1197 = vsel %vm312, %v1058, 0
  %1199 = vmatprep.subr.bf16.mxu0 %v960
  %1200 = vmatpush1.bf16.msra.mxu0 %v959
  %1201 = vmatprep.subr.bf16.mxu0 %v956
  %1202 = vmatpush1.bf16.msra.mxu0 %v955
  %1203 = vmatprep.subr.bf16.mxu0 %v952
  %1204 = vmatpush1.bf16.msra.mxu0 %v951
  %1205 = vmatprep.subr.bf16.mxu0 %v948
  %1206 = vmatpush1.bf16.msra.mxu0 %v947
  %1207 = vmatprep.subr.bf16.mxu0 %v944
  %1208 = vmatpush1.bf16.msra.mxu0 %v943
  %1209 = vmatprep.subr.bf16.mxu0 %v940
  %1210 = vmatpush1.bf16.msra.mxu0 %v939
  %1211 = vmatprep.subr.bf16.mxu0 %v936
  %1212 = vmatpush1.bf16.msra.mxu0 %v935
  %1213 = vmatprep.subr.bf16.mxu0 %v932
  %1214 = vmatpush1.bf16.msra.mxu0 %v931
  %1215 = vmatprep.subr.bf16.mxu0 %v992
  %1216 = vmatpush2.bf16.msra.mxu0 %v991
  %1217 = vmatprep.subr.bf16.mxu0 %v988
  %1218 = vmatpush2.bf16.msra.mxu0 %v987
  %1219 = vmatprep.subr.bf16.mxu0 %v984
  %1220 = vmatpush2.bf16.msra.mxu0 %v983
  %1221 = vmatprep.subr.bf16.mxu0 %v980
  %1222 = vmatpush2.bf16.msra.mxu0 %v979
  %1223 = vmatprep.subr.bf16.mxu0 %v976
  %1224 = vmatpush2.bf16.msra.mxu0 %v975
  %1225 = vmatprep.subr.bf16.mxu0 %v972
  %1226 = vmatpush2.bf16.msra.mxu0 %v971
  %1227 = vmatprep.subr.bf16.mxu0 %v968
  %1228 = vmatpush2.bf16.msra.mxu0 %v967
  %1229 = vmatprep.subr.bf16.mxu0 %v964
  %1230 = vmatpush2.bf16.msra.mxu0 %v963
  %1231 = vmatprep.mubr.bf16.mxu0 %v528
  %1232 = vmatmul.mubr.bf16.gmra.mxu0 %v527
  %v1233 = vpop.f32.mrf.mxu0
  %v1234 = vadd.f32 %v536, %v1233
  %v1235 = vpop.f32.mrf.mxu0
  %v1236 = vadd.f32 %v540, %v1235
  %v1237 = vpop.f32.mrf.mxu0
  %v1238 = vpop.f32.mrf.mxu0
  %1239 = vdwg.mxu0
  %1240 = vmatprep.subr.bf16.mxu0 %v1024
  %1241 = vmatpush1.bf16.msra.mxu0 %v1023
  %1242 = vmatprep.subr.bf16.mxu0 %v1020
  %1243 = vmatpush1.bf16.msra.mxu0 %v1019
  %1244 = vmatprep.subr.bf16.mxu0 %v1016
  %1245 = vmatpush1.bf16.msra.mxu0 %v1015
  %1246 = vmatprep.subr.bf16.mxu0 %v1012
  %1247 = vmatpush1.bf16.msra.mxu0 %v1011
  %1248 = vmatprep.subr.bf16.mxu0 %v1008
  %1249 = vmatpush1.bf16.msra.mxu0 %v1007
  %1250 = vmatprep.subr.bf16.mxu0 %v1004
  %1251 = vmatpush1.bf16.msra.mxu0 %v1003
  %1252 = vmatprep.subr.bf16.mxu0 %v1000
  %1253 = vmatpush1.bf16.msra.mxu0 %v999
  %1254 = vmatprep.subr.bf16.mxu0 %v996
  %1255 = vmatpush1.bf16.msra.mxu0 %v995
  %1256 = vmatprep.subr.bf16.mxu0 %v1191
  %1257 = vmatpush2.bf16.msra.mxu0 %v1188
  %1258 = vmatprep.subr.bf16.mxu0 %v1052
  %1259 = vmatpush2.bf16.msra.mxu0 %v1051
  %1260 = vmatprep.subr.bf16.mxu0 %v1048
  %1261 = vmatpush2.bf16.msra.mxu0 %v1047
  %1262 = vmatprep.subr.bf16.mxu0 %v1044
  %1263 = vmatpush2.bf16.msra.mxu0 %v1043
  %1264 = vmatprep.subr.bf16.mxu0 %v1040
  %1265 = vmatpush2.bf16.msra.mxu0 %v1039
  %1266 = vmatprep.subr.bf16.mxu0 %v1036
  %1267 = vmatpush2.bf16.msra.mxu0 %v1035
  %1268 = vmatprep.subr.bf16.mxu0 %v1032
  %1269 = vmatpush2.bf16.msra.mxu0 %v1031
  %1270 = vmatprep.subr.bf16.mxu0 %v1028
  %1271 = vmatpush2.bf16.msra.mxu0 %v1027
  %1272 = vmatprep.mubr.bf16.mxu0 %v1185
  %1273 = vmatmul.mubr.bf16.gmra.mxu0 %v529
  %v1274 = vpop.f32.mrf.mxu0
  %v1275 = vadd.f32 %v1234, %v1274
  %v1276 = vpop.f32.mrf.mxu0
  %v1277 = vadd.f32 %v1236, %v1276
  %v1278 = vpop.f32.mrf.mxu0
  %v1279 = vpop.f32.mrf.mxu0
  %1280 = vdwg.mxu0
  %1281 = vmatprep.subr.bf16.mxu0 %v962
  %1282 = vmatpush1.bf16.msra.mxu0 %v961
  %1283 = vmatprep.subr.bf16.mxu0 %v958
  %1284 = vmatpush1.bf16.msra.mxu0 %v957
  %1285 = vmatprep.subr.bf16.mxu0 %v954
  %1286 = vmatpush1.bf16.msra.mxu0 %v953
  %1287 = vmatprep.subr.bf16.mxu0 %v950
  %1288 = vmatpush1.bf16.msra.mxu0 %v949
  %1289 = vmatprep.subr.bf16.mxu0 %v946
  %1290 = vmatpush1.bf16.msra.mxu0 %v945
  %1291 = vmatprep.subr.bf16.mxu0 %v942
  %1292 = vmatpush1.bf16.msra.mxu0 %v941
  %1293 = vmatprep.subr.bf16.mxu0 %v938
  %1294 = vmatpush1.bf16.msra.mxu0 %v937
  %1295 = vmatprep.subr.bf16.mxu0 %v934
  %1296 = vmatpush1.bf16.msra.mxu0 %v933
  %1297 = vmatprep.subr.bf16.mxu0 %v994
  %1298 = vmatpush2.bf16.msra.mxu0 %v993
  %1299 = vmatprep.subr.bf16.mxu0 %v990
  %1300 = vmatpush2.bf16.msra.mxu0 %v989
  %1301 = vmatprep.subr.bf16.mxu0 %v986
  %1302 = vmatpush2.bf16.msra.mxu0 %v985
  %1303 = vmatprep.subr.bf16.mxu0 %v982
  %1304 = vmatpush2.bf16.msra.mxu0 %v981
  %1305 = vmatprep.subr.bf16.mxu0 %v978
  %1306 = vmatpush2.bf16.msra.mxu0 %v977
  %1307 = vmatprep.subr.bf16.mxu0 %v974
  %1308 = vmatpush2.bf16.msra.mxu0 %v973
  %1309 = vmatprep.subr.bf16.mxu0 %v970
  %1310 = vmatpush2.bf16.msra.mxu0 %v969
  %1311 = vmatprep.subr.bf16.mxu0 %v966
  %1312 = vmatpush2.bf16.msra.mxu0 %v965
  %1313 = vmatprep.mubr.bf16.mxu0 %v528
  %1314 = vmatmul.mubr.bf16.gmra.mxu0 %v527
  %v1315 = vpop.f32.mrf.mxu0
  %v1316 = vadd.f32 %v544, %v1315
  %v1317 = vpop.f32.mrf.mxu0
  %v1318 = vadd.f32 %v548, %v1317
  %v1319 = vpop.f32.mrf.mxu0
  %v1320 = vpop.f32.mrf.mxu0
  %1321 = vdwg.mxu0
  %1322 = vmatprep.subr.bf16.mxu0 %v1026
  %1323 = vmatpush1.bf16.msra.mxu0 %v1025
  %1324 = vmatprep.subr.bf16.mxu0 %v1022
  %1325 = vmatpush1.bf16.msra.mxu0 %v1021
  %1326 = vmatprep.subr.bf16.mxu0 %v1018
  %1327 = vmatpush1.bf16.msra.mxu0 %v1017
  %1328 = vmatprep.subr.bf16.mxu0 %v1014
  %1329 = vmatpush1.bf16.msra.mxu0 %v1013
  %1330 = vmatprep.subr.bf16.mxu0 %v1010
  %1331 = vmatpush1.bf16.msra.mxu0 %v1009
  %1332 = vmatprep.subr.bf16.mxu0 %v1006
  %1333 = vmatpush1.bf16.msra.mxu0 %v1005
  %1334 = vmatprep.subr.bf16.mxu0 %v1002
  %1335 = vmatpush1.bf16.msra.mxu0 %v1001
  %1336 = vmatprep.subr.bf16.mxu0 %v998
  %1337 = vmatpush1.bf16.msra.mxu0 %v997
  %1338 = vmatprep.subr.bf16.mxu0 %v1197
  %1339 = vmatpush2.bf16.msra.mxu0 %v1194
  %1340 = vmatprep.subr.bf16.mxu0 %v1054
  %1341 = vmatpush2.bf16.msra.mxu0 %v1053
  %1342 = vmatprep.subr.bf16.mxu0 %v1050
  %1343 = vmatpush2.bf16.msra.mxu0 %v1049
  %1344 = vmatprep.subr.bf16.mxu0 %v1046
  %1345 = vmatpush2.bf16.msra.mxu0 %v1045
  %1346 = vmatprep.subr.bf16.mxu0 %v1042
  %1347 = vmatpush2.bf16.msra.mxu0 %v1041
  %1348 = vmatprep.subr.bf16.mxu0 %v1038
  %1349 = vmatpush2.bf16.msra.mxu0 %v1037
  %1350 = vmatprep.subr.bf16.mxu0 %v1034
  %1351 = vmatpush2.bf16.msra.mxu0 %v1033
  %1352 = vmatprep.subr.bf16.mxu0 %v1030
  %1353 = vmatpush2.bf16.msra.mxu0 %v1029
  %1354 = vmatprep.mubr.bf16.mxu0 %v1185
  %1355 = vmatmul.mubr.bf16.gmra.mxu0 %v529
  %v1356 = vpop.f32.mrf.mxu0
  %v1357 = vadd.f32 %v1316, %v1356
  %v1358 = vpop.f32.mrf.mxu0
  %v1359 = vadd.f32 %v1318, %v1358
  %v1360 = vpop.f32.mrf.mxu0
  %v1361 = vpop.f32.mrf.mxu0
  %1362 = vdwg.mxu0
  %v1363 = vmax.f32 %v1275, 0.0
  %v1364 = vmax.f32 %v1277, 0.0
  %v1365 = vmax.f32 %v1357, 0.0
  %v1366 = vmax.f32 %v1359, 0.0
  %v1367 = vsel %vm312, %v1363, 0.0
  %v1368 = vsel %vm312, %v1364, 0.0
  %v1369 = vadd.f32 %v1367, %v1368
  %v1370 = vsel %vm312, %v1365, 0.0
  %v1371 = vadd.f32 %v1369, %v1370
  %vm1372 = vcmask 123904
  %v1373 = vsel %vm1372, %v1366, 0.0
  %v1374 = vadd.f32 %v1371, %v1373
  %1375 = vadd.xlane.f32.xlu0 %v1374
  %v1376 = vpop.xlane.xlu0 %1375
  %v1377 = vrcp.pop 400.0
  %v1378 = vmul.f32 %v1376, %v1377
  %v1379 = vsub.f32 %v1363, %v1378
  %v1380 = vsub.f32 %v1364, %v1378
  %v1381 = vsub.f32 %v1365, %v1378
  %v1382 = vsub.f32 %v1366, %v1378
  %v1383 = vmul.f32 %v1379, %v1379
  %v1384 = vmul.f32 %v1380, %v1380
  %v1385 = vmul.f32 %v1381, %v1381
  %v1386 = vmul.f32 %v1382, %v1382
  %v1387 = vsel %vm312, %v1383, 0.0
  %v1388 = vsel %vm312, %v1384, 0.0
  %v1389 = vadd.f32 %v1387, %v1388
  %v1390 = vsel %vm312, %v1385, 0.0
  %v1391 = vadd.f32 %v1389, %v1390
  %v1392 = vsel %vm1372, %v1386, 0.0
  %v1393 = vadd.f32 %v1391, %v1392
  %1394 = vadd.xlane.f32.xlu0 %v1393
  %v1395 = vpop.xlane.xlu0 %1394
  %v1396 = vmul.f32 %v1395, %v1377
  %v1397 = vadd.f32 %v1396, 1e-05
  %v1398 = vrsqrt.pop %v1397
  %v1399 = vmul.f32 %v1379, %v1398
  %v1400 = vmul.f32 %v1380, %v1398
  %v1401 = vmul.f32 %v1381, %v1398
  %v1402 = vmul.f32 %v1382, %v1398
  %v1403 = vld [vmem:[%s9] sm:$0xf]
  %v1405 = vlaneseq
  %v1406 = vshrl.u32 %v1405, 7
  %v1407 = vsub.s32 0, %v1406
  %v1408 = vrot.slane %v1403, %v1407
  %v1409 = vlaneseq
  %v1410 = vshrl.u32 %v1409, 7
  %v1411 = vsub.s32 1, %v1410
  %v1412 = vrot.slane %v1403, %v1411
  %v1413 = vlaneseq
  %v1414 = vshrl.u32 %v1413, 7
  %v1415 = vsub.s32 2, %v1414
  %v1416 = vrot.slane %v1403, %v1415
  %v1417 = vlaneseq
  %v1418 = vshrl.u32 %v1417, 7
  %v1419 = vsub.s32 3, %v1418
  %v1420 = vrot.slane %v1403, %v1419
  %v1425 = vmul.f32 %v1399, %v1408
  %v1426 = vmul.f32 %v1400, %v1412
  %v1427 = vmul.f32 %v1401, %v1416
  %v1428 = vmul.f32 %v1402, %v1420
  %v1429 = vld [vmem:[%s10] sm:$0xf]
  %v1431 = vlaneseq
  %v1432 = vshrl.u32 %v1431, 7
  %v1433 = vsub.s32 0, %v1432
  %v1434 = vrot.slane %v1429, %v1433
  %v1435 = vlaneseq
  %v1436 = vshrl.u32 %v1435, 7
  %v1437 = vsub.s32 1, %v1436
  %v1438 = vrot.slane %v1429, %v1437
  %v1439 = vlaneseq
  %v1440 = vshrl.u32 %v1439, 7
  %v1441 = vsub.s32 2, %v1440
  %v1442 = vrot.slane %v1429, %v1441
  %v1443 = vlaneseq
  %v1444 = vshrl.u32 %v1443, 7
  %v1445 = vsub.s32 3, %v1444
  %v1446 = vrot.slane %v1429, %v1445
  %v1451 = vadd.f32 %v1425, %v1434
  %v1452 = vadd.f32 %v1426, %v1438
  %v1453 = vadd.f32 %v1427, %v1442
  %v1454 = vadd.f32 %v1428, %v1446
  %v1455 = vld [vmem:[%s11] sm:$0xff]
  %v1456 = vld [vmem:[%s11 + $0x8] sm:$0xff]
  %v1457 = vld [vmem:[%s11 + $0x10] sm:$0xff]
  %v1458 = vld [vmem:[%s11 + $0x18] sm:$0xff]
  %v1459 = vld [vmem:[%s11 + $0x20] sm:$0xff]
  %v1460 = vld [vmem:[%s11 + $0x28] sm:$0xff]
  %v1461 = vld [vmem:[%s11 + $0x30] sm:$0xff]
  %v1462 = vld [vmem:[%s11 + $0x38] sm:$0xff]
  %v1463 = vld [vmem:[%s11 + $0x40] sm:$0xff]
  %v1464 = vld [vmem:[%s11 + $0x48] sm:$0xff]
  %v1465 = vld [vmem:[%s11 + $0x50] sm:$0xff]
  %v1466 = vld [vmem:[%s11 + $0x58] sm:$0xff]
  %v1467 = vld [vmem:[%s11 + $0x60] sm:$0xff]
  %v1468 = vld [vmem:[%s11 + $0x68] sm:$0xff]
  %v1469 = vld [vmem:[%s11 + $0x70] sm:$0xff]
  %v1470 = vld [vmem:[%s11 + $0x78] sm:$0xff]
  %v1471 = vld [vmem:[%s11 + $0x80] sm:$0xff]
  %v1472 = vld [vmem:[%s11 + $0x88] sm:$0xff]
  %v1473 = vld [vmem:[%s11 + $0x90] sm:$0xff]
  %v1474 = vld [vmem:[%s11 + $0x98] sm:$0xff]
  %v1475 = vld [vmem:[%s11 + $0xa0] sm:$0xff]
  %v1476 = vld [vmem:[%s11 + $0xa8] sm:$0xff]
  %v1477 = vld [vmem:[%s11 + $0xb0] sm:$0xff]
  %v1478 = vld [vmem:[%s11 + $0xb8] sm:$0xff]
  %v1479 = vld [vmem:[%s11 + $0xc0] sm:$0xff]
  %v1480 = vld [vmem:[%s11 + $0xc8] sm:$0xff]
  %v1481 = vld [vmem:[%s11 + $0xd0] sm:$0xff]
  %v1482 = vld [vmem:[%s11 + $0xd8] sm:$0xff]
  %v1483 = vld [vmem:[%s11 + $0xe0] sm:$0xff]
  %v1484 = vld [vmem:[%s11 + $0xe8] sm:$0xff]
  %v1485 = vld [vmem:[%s11 + $0xf0] sm:$0xff]
  %v1486 = vld [vmem:[%s11 + $0xf8] sm:$0xff]
  %v1487 = vld [vmem:[%s11 + $0x100] sm:$0xff]
  %v1488 = vld [vmem:[%s11 + $0x108] sm:$0xff]
  %v1489 = vld [vmem:[%s11 + $0x110] sm:$0xff]
  %v1490 = vld [vmem:[%s11 + $0x118] sm:$0xff]
  %v1491 = vld [vmem:[%s11 + $0x120] sm:$0xff]
  %v1492 = vld [vmem:[%s11 + $0x128] sm:$0xff]
  %v1493 = vld [vmem:[%s11 + $0x130] sm:$0xff]
  %v1494 = vld [vmem:[%s11 + $0x138] sm:$0xff]
  %v1495 = vld [vmem:[%s11 + $0x140] sm:$0xff]
  %v1496 = vld [vmem:[%s11 + $0x148] sm:$0xff]
  %v1497 = vld [vmem:[%s11 + $0x150] sm:$0xff]
  %v1498 = vld [vmem:[%s11 + $0x158] sm:$0xff]
  %v1499 = vld [vmem:[%s11 + $0x160] sm:$0xff]
  %v1500 = vld [vmem:[%s11 + $0x168] sm:$0xff]
  %v1501 = vld [vmem:[%s11 + $0x170] sm:$0xff]
  %v1502 = vld [vmem:[%s11 + $0x178] sm:$0xff]
  %v1503 = vld [vmem:[%s11 + $0x180] sm:$0xff]
  %v1504 = vld [vmem:[%s11 + $0x188] sm:$0xff]
  %v1505 = vpack.c.bf16 %v1451, %v1451
  %v1506 = vpack.c.bf16 %v1452, %v1452
  %v1507 = vpack.c.bf16 %v1453, %v1453
  %v1508 = vpack.c.bf16 %v1454, %v1454
  %v1509 = vld [vmem:[%s12] sm:$0x3]
  %v1511 = vlaneseq
  %v1512 = vshrl.u32 %v1511, 7
  %v1513 = vsub.s32 0, %v1512
  %v1514 = vrot.slane %v1509, %v1513
  %v1515 = vlaneseq
  %v1516 = vshrl.u32 %v1515, 7
  %v1517 = vsub.s32 1, %v1516
  %v1518 = vrot.slane %v1509, %v1517
  %v1571 = vunpack.c.l.b16 %v1455
  %v1572 = vunpack.c.h.b16 %v1455
  %v1573 = vunpack.c.l.b16 %v1456
  %v1574 = vunpack.c.h.b16 %v1456
  %v1575 = vunpack.c.l.b16 %v1457
  %v1576 = vunpack.c.h.b16 %v1457
  %v1577 = vunpack.c.l.b16 %v1458
  %v1578 = vunpack.c.h.b16 %v1458
  %v1579 = vunpack.c.l.b16 %v1459
  %v1580 = vunpack.c.h.b16 %v1459
  %v1581 = vunpack.c.l.b16 %v1460
  %v1582 = vunpack.c.h.b16 %v1460
  %v1583 = vunpack.c.l.b16 %v1461
  %v1584 = vunpack.c.h.b16 %v1461
  %v1585 = vunpack.c.l.b16 %v1462
  %v1586 = vunpack.c.h.b16 %v1462
  %v1587 = vunpack.c.l.b16 %v1463
  %v1588 = vunpack.c.h.b16 %v1463
  %v1589 = vunpack.c.l.b16 %v1464
  %v1590 = vunpack.c.h.b16 %v1464
  %v1591 = vunpack.c.l.b16 %v1465
  %v1592 = vunpack.c.h.b16 %v1465
  %v1593 = vunpack.c.l.b16 %v1466
  %v1594 = vunpack.c.h.b16 %v1466
  %v1595 = vunpack.c.l.b16 %v1467
  %v1596 = vunpack.c.h.b16 %v1467
  %v1597 = vunpack.c.l.b16 %v1468
  %v1598 = vunpack.c.h.b16 %v1468
  %v1599 = vunpack.c.l.b16 %v1469
  %v1600 = vunpack.c.h.b16 %v1469
  %v1601 = vunpack.c.l.b16 %v1470
  %v1602 = vunpack.c.h.b16 %v1470
  %v1603 = vunpack.c.l.b16 %v1471
  %v1604 = vunpack.c.h.b16 %v1471
  %v1605 = vunpack.c.l.b16 %v1472
  %v1606 = vunpack.c.h.b16 %v1472
  %v1607 = vunpack.c.l.b16 %v1473
  %v1608 = vunpack.c.h.b16 %v1473
  %v1609 = vunpack.c.l.b16 %v1474
  %v1610 = vunpack.c.h.b16 %v1474
  %v1611 = vunpack.c.l.b16 %v1475
  %v1612 = vunpack.c.h.b16 %v1475
  %v1613 = vunpack.c.l.b16 %v1476
  %v1614 = vunpack.c.h.b16 %v1476
  %v1615 = vunpack.c.l.b16 %v1477
  %v1616 = vunpack.c.h.b16 %v1477
  %v1617 = vunpack.c.l.b16 %v1478
  %v1618 = vunpack.c.h.b16 %v1478
  %v1619 = vunpack.c.l.b16 %v1479
  %v1620 = vunpack.c.h.b16 %v1479
  %v1621 = vunpack.c.l.b16 %v1480
  %v1622 = vunpack.c.h.b16 %v1480
  %v1623 = vunpack.c.l.b16 %v1481
  %v1624 = vunpack.c.h.b16 %v1481
  %v1625 = vunpack.c.l.b16 %v1482
  %v1626 = vunpack.c.h.b16 %v1482
  %v1627 = vunpack.c.l.b16 %v1483
  %v1628 = vunpack.c.h.b16 %v1483
  %v1629 = vunpack.c.l.b16 %v1484
  %v1630 = vunpack.c.h.b16 %v1484
  %v1631 = vunpack.c.l.b16 %v1485
  %v1632 = vunpack.c.h.b16 %v1485
  %v1633 = vunpack.c.l.b16 %v1486
  %v1634 = vunpack.c.h.b16 %v1486
  %v1635 = vunpack.c.l.b16 %v1487
  %v1636 = vunpack.c.h.b16 %v1487
  %v1637 = vunpack.c.l.b16 %v1488
  %v1638 = vunpack.c.h.b16 %v1488
  %v1639 = vunpack.c.l.b16 %v1489
  %v1640 = vunpack.c.h.b16 %v1489
  %v1641 = vunpack.c.l.b16 %v1490
  %v1642 = vunpack.c.h.b16 %v1490
  %v1643 = vunpack.c.l.b16 %v1491
  %v1644 = vunpack.c.h.b16 %v1491
  %v1645 = vunpack.c.l.b16 %v1492
  %v1646 = vunpack.c.h.b16 %v1492
  %v1647 = vunpack.c.l.b16 %v1493
  %v1648 = vunpack.c.h.b16 %v1493
  %v1649 = vunpack.c.l.b16 %v1494
  %v1650 = vunpack.c.h.b16 %v1494
  %v1651 = vunpack.c.l.b16 %v1495
  %v1652 = vunpack.c.h.b16 %v1495
  %v1653 = vunpack.c.l.b16 %v1496
  %v1654 = vunpack.c.h.b16 %v1496
  %v1655 = vunpack.c.l.b16 %v1497
  %v1656 = vunpack.c.h.b16 %v1497
  %v1657 = vunpack.c.l.b16 %v1498
  %v1658 = vunpack.c.h.b16 %v1498
  %v1659 = vunpack.c.l.b16 %v1499
  %v1660 = vunpack.c.h.b16 %v1499
  %v1661 = vunpack.c.l.b16 %v1500
  %v1662 = vunpack.c.h.b16 %v1500
  %v1663 = vunpack.c.l.b16 %v1501
  %v1664 = vunpack.c.h.b16 %v1501
  %v1665 = vunpack.c.l.b16 %v1502
  %v1666 = vunpack.c.h.b16 %v1502
  %v1667 = vunpack.c.l.b16 %v1503
  %v1668 = vunpack.c.h.b16 %v1503
  %v1669 = vunpack.c.l.b16 %v1504
  %v1670 = vunpack.c.h.b16 %v1504
  %v1671 = vpack.c.b16 %v1573, %v1571
  %v1672 = vpack.c.b16 %v1574, %v1572
  %v1673 = vpack.c.b16 %v1577, %v1575
  %v1674 = vpack.c.b16 %v1578, %v1576
  %v1675 = vpack.c.b16 %v1581, %v1579
  %v1676 = vpack.c.b16 %v1582, %v1580
  %v1677 = vpack.c.b16 %v1585, %v1583
  %v1678 = vpack.c.b16 %v1586, %v1584
  %v1679 = vpack.c.b16 %v1589, %v1587
  %v1680 = vpack.c.b16 %v1590, %v1588
  %v1681 = vpack.c.b16 %v1593, %v1591
  %v1682 = vpack.c.b16 %v1594, %v1592
  %v1683 = vpack.c.b16 %v1597, %v1595
  %v1684 = vpack.c.b16 %v1598, %v1596
  %v1685 = vpack.c.b16 %v1601, %v1599
  %v1686 = vpack.c.b16 %v1602, %v1600
  %v1687 = vpack.c.b16 %v1605, %v1603
  %v1688 = vpack.c.b16 %v1606, %v1604
  %v1689 = vpack.c.b16 %v1609, %v1607
  %v1690 = vpack.c.b16 %v1610, %v1608
  %v1691 = vpack.c.b16 %v1613, %v1611
  %v1692 = vpack.c.b16 %v1614, %v1612
  %v1693 = vpack.c.b16 %v1617, %v1615
  %v1694 = vpack.c.b16 %v1618, %v1616
  %v1695 = vpack.c.b16 %v1621, %v1619
  %v1696 = vpack.c.b16 %v1622, %v1620
  %v1697 = vpack.c.b16 %v1625, %v1623
  %v1698 = vpack.c.b16 %v1626, %v1624
  %v1699 = vpack.c.b16 %v1629, %v1627
  %v1700 = vpack.c.b16 %v1630, %v1628
  %v1701 = vpack.c.b16 %v1633, %v1631
  %v1702 = vpack.c.b16 %v1634, %v1632
  %v1703 = vpack.c.b16 %v1637, %v1635
  %v1704 = vpack.c.b16 %v1638, %v1636
  %v1705 = vpack.c.b16 %v1641, %v1639
  %v1706 = vpack.c.b16 %v1642, %v1640
  %v1707 = vpack.c.b16 %v1645, %v1643
  %v1708 = vpack.c.b16 %v1646, %v1644
  %v1709 = vpack.c.b16 %v1649, %v1647
  %v1710 = vpack.c.b16 %v1650, %v1648
  %v1711 = vpack.c.b16 %v1653, %v1651
  %v1712 = vpack.c.b16 %v1654, %v1652
  %v1713 = vpack.c.b16 %v1657, %v1655
  %v1714 = vpack.c.b16 %v1658, %v1656
  %v1715 = vpack.c.b16 %v1661, %v1659
  %v1716 = vpack.c.b16 %v1662, %v1660
  %v1717 = vpack.c.b16 %v1665, %v1663
  %v1718 = vpack.c.b16 %v1666, %v1664
  %v1719 = vpack.c.b16 %v1669, %v1667
  %v1720 = vpack.c.b16 %v1670, %v1668
  %v1772 = vsel %vm196, %v1508, 0
  %1774 = vmatprep.subr.bf16.mxu0 %v1686
  %1775 = vmatpush1.bf16.msra.mxu0 %v1685
  %1776 = vmatprep.subr.bf16.mxu0 %v1684
  %1777 = vmatpush1.bf16.msra.mxu0 %v1683
  %1778 = vmatprep.subr.bf16.mxu0 %v1682
  %1779 = vmatpush1.bf16.msra.mxu0 %v1681
  %1780 = vmatprep.subr.bf16.mxu0 %v1680
  %1781 = vmatpush1.bf16.msra.mxu0 %v1679
  %1782 = vmatprep.subr.bf16.mxu0 %v1678
  %1783 = vmatpush1.bf16.msra.mxu0 %v1677
  %1784 = vmatprep.subr.bf16.mxu0 %v1676
  %1785 = vmatpush1.bf16.msra.mxu0 %v1675
  %1786 = vmatprep.subr.bf16.mxu0 %v1674
  %1787 = vmatpush1.bf16.msra.mxu0 %v1673
  %1788 = vmatprep.subr.bf16.mxu0 %v1672
  %1789 = vmatpush1.bf16.msra.mxu0 %v1671
  %1790 = vmatprep.subr.bf16.mxu0 %v1702
  %1791 = vmatpush2.bf16.msra.mxu0 %v1701
  %1792 = vmatprep.subr.bf16.mxu0 %v1700
  %1793 = vmatpush2.bf16.msra.mxu0 %v1699
  %1794 = vmatprep.subr.bf16.mxu0 %v1698
  %1795 = vmatpush2.bf16.msra.mxu0 %v1697
  %1796 = vmatprep.subr.bf16.mxu0 %v1696
  %1797 = vmatpush2.bf16.msra.mxu0 %v1695
  %1798 = vmatprep.subr.bf16.mxu0 %v1694
  %1799 = vmatpush2.bf16.msra.mxu0 %v1693
  %1800 = vmatprep.subr.bf16.mxu0 %v1692
  %1801 = vmatpush2.bf16.msra.mxu0 %v1691
  %1802 = vmatprep.subr.bf16.mxu0 %v1690
  %1803 = vmatpush2.bf16.msra.mxu0 %v1689
  %1804 = vmatprep.subr.bf16.mxu0 %v1688
  %1805 = vmatpush2.bf16.msra.mxu0 %v1687
  %1806 = vmatprep.mubr.bf16.mxu0 %v1506
  %1807 = vmatmul.mubr.bf16.gmra.mxu0 %v1505
  %v1808 = vpop.f32.mrf.mxu0
  %v1809 = vadd.f32 %v1514, %v1808
  %v1810 = vpop.f32.mrf.mxu0
  %v1811 = vadd.f32 %v1518, %v1810
  %v1812 = vpop.f32.mrf.mxu0
  %v1813 = vpop.f32.mrf.mxu0
  %1814 = vdwg.mxu0
  %1815 = vmatprep.subr.bf16.mxu0 %v1718
  %1816 = vmatpush1.bf16.msra.mxu0 %v1717
  %1817 = vmatprep.subr.bf16.mxu0 %v1716
  %1818 = vmatpush1.bf16.msra.mxu0 %v1715
  %1819 = vmatprep.subr.bf16.mxu0 %v1714
  %1820 = vmatpush1.bf16.msra.mxu0 %v1713
  %1821 = vmatprep.subr.bf16.mxu0 %v1712
  %1822 = vmatpush1.bf16.msra.mxu0 %v1711
  %1823 = vmatprep.subr.bf16.mxu0 %v1710
  %1824 = vmatpush1.bf16.msra.mxu0 %v1709
  %1825 = vmatprep.subr.bf16.mxu0 %v1708
  %1826 = vmatpush1.bf16.msra.mxu0 %v1707
  %1827 = vmatprep.subr.bf16.mxu0 %v1706
  %1828 = vmatpush1.bf16.msra.mxu0 %v1705
  %1829 = vmatprep.subr.bf16.mxu0 %v1704
  %1830 = vmatpush1.bf16.msra.mxu0 %v1703
  %1831 = vmatprep.subr.bf16.mxu0 0
  %1832 = vmatpush2.bf16.msra.mxu0 0
  %1833 = vmatprep.subr.bf16.mxu0 0
  %1834 = vmatpush2.bf16.msra.mxu0 0
  %1835 = vmatprep.subr.bf16.mxu0 0
  %1836 = vmatpush2.bf16.msra.mxu0 0
  %1837 = vmatprep.subr.bf16.mxu0 0
  %1838 = vmatpush2.bf16.msra.mxu0 0
  %1839 = vmatprep.subr.bf16.mxu0 0
  %1840 = vmatpush2.bf16.msra.mxu0 0
  %1841 = vmatprep.subr.bf16.mxu0 0
  %1842 = vmatpush2.bf16.msra.mxu0 0
  %1843 = vmatprep.subr.bf16.mxu0 0
  %1844 = vmatpush2.bf16.msra.mxu0 0
  %1845 = vmatprep.subr.bf16.mxu0 %v1720
  %1846 = vmatpush2.bf16.msra.mxu0 %v1719
  %1847 = vmatprep.mubr.bf16.mxu0 %v1772
  %1848 = vmatmul.mubr.bf16.gmra.mxu0 %v1507
  %v1849 = vpop.f32.mrf.mxu0
  %v1850 = vadd.f32 %v1809, %v1849
  %v1851 = vpop.f32.mrf.mxu0
  %v1852 = vadd.f32 %v1811, %v1851
  %v1853 = vpop.f32.mrf.mxu0
  %v1854 = vpop.f32.mrf.mxu0
  %1855 = vdwg.mxu0
  %v1856 = vmax.f32 %v1850, 0.0
  %v1857 = vmax.f32 %v1852, 0.0
  %v1858 = vsel %vm312, %v1856, 0.0
  %vm1859 = vcmask 582656
  %v1860 = vsel %vm1859, %v1857, 0.0
  %v1861 = vadd.f32 %v1858, %v1860
  %1862 = vadd.xlane.f32.xlu0 %v1861
  %v1863 = vpop.xlane.xlu0 %1862
  %v1864 = vrcp.pop 200.0
  %v1865 = vmul.f32 %v1863, %v1864
  %v1866 = vsub.f32 %v1856, %v1865
  %v1867 = vsub.f32 %v1857, %v1865
  %v1868 = vmul.f32 %v1866, %v1866
  %v1869 = vmul.f32 %v1867, %v1867
  %v1870 = vsel %vm312, %v1868, 0.0
  %v1871 = vsel %vm1859, %v1869, 0.0
  %v1872 = vadd.f32 %v1870, %v1871
  %1873 = vadd.xlane.f32.xlu0 %v1872
  %v1874 = vpop.xlane.xlu0 %1873
  %v1875 = vmul.f32 %v1874, %v1864
  %v1876 = vadd.f32 %v1875, 1e-05
  %v1877 = vrsqrt.pop %v1876
  %v1878 = vmul.f32 %v1866, %v1877
  %v1879 = vmul.f32 %v1867, %v1877
  %v1880 = vld [vmem:[%s13] sm:$0x3]
  %v1882 = vlaneseq
  %v1883 = vshrl.u32 %v1882, 7
  %v1884 = vsub.s32 0, %v1883
  %v1885 = vrot.slane %v1880, %v1884
  %v1886 = vlaneseq
  %v1887 = vshrl.u32 %v1886, 7
  %v1888 = vsub.s32 1, %v1887
  %v1889 = vrot.slane %v1880, %v1888
  %v1892 = vmul.f32 %v1878, %v1885
  %v1893 = vmul.f32 %v1879, %v1889
  %v1894 = vld [vmem:[%s14] sm:$0x3]
  %v1896 = vlaneseq
  %v1897 = vshrl.u32 %v1896, 7
  %v1898 = vsub.s32 0, %v1897
  %v1899 = vrot.slane %v1894, %v1898
  %v1900 = vlaneseq
  %v1901 = vshrl.u32 %v1900, 7
  %v1902 = vsub.s32 1, %v1901
  %v1903 = vrot.slane %v1894, %v1902
  %v1906 = vadd.f32 %v1892, %v1899
  %v1907 = vadd.f32 %v1893, %v1903
  %v1908 = vld [vmem:[%s15] sm:$0x3]
  %v1910 = vlaneseq
  %v1911 = vshrl.u32 %v1910, 7
  %v1912 = vsub.s32 0, %v1911
  %v1913 = vrot.slane %v1908, %v1912
  %v1914 = vlaneseq
  %v1915 = vshrl.u32 %v1914, 7
  %v1916 = vsub.s32 1, %v1915
  %v1917 = vrot.slane %v1908, %v1916
  %v1920 = vmul.f32 %v1906, %v1913
  %v1921 = vmul.f32 %v1907, %v1917
  %v1922 = vsel %vm312, %v1920, 0.0
  %v1923 = vsel %vm1859, %v1921, 0.0
  %v1924 = vadd.f32 %v1922, %v1923
  %1925 = vadd.xlane.f32.xlu0 %v1924
  %v1926 = vpop.xlane.xlu0 %1925
  %v1927 = vld [vmem:[#allocation2] sm:$0x1]
  %v1929 = vlaneseq
  %v1930 = vshrl.u32 %v1929, 7
  %v1931 = vsub.s32 0, %v1930
  %v1932 = vrot.slane %v1927, %v1931
  %v1934 = vadd.f32 %v1926, %v1932
  %vm1935 = vcmask 1024
  %1936 = vst.msk [vmem:[%s17] sm:$0x3] %vm1935, %v1934
  // Predicated region
  $region70: #{q_forward.1} parent=0 // pred_check
    _
  $region71: #{q_forward.1} parent=0 // pred_check_branch
    %1938 = sbr.rel (0) target = $region73
  $region72: #{q_forward.1} parent=0 // pred_region
    _
  $region73: #{q_forward.1} parent=0 // pred_fallthru
    _
  // Predicated region
  $region74: #{q_forward.1} parent=0 // pred_check
    _
  $region75: #{q_forward.1} parent=0 // pred_check_branch
    %1940 = sbr.rel (0) target = $region77
  $region76: #{q_forward.1} parent=0 // pred_region
    _
  $region77: #{q_forward.1} parent=0 // pred_fallthru
    _

</llo_original>
